<compile_context>
chip_gen: v7x
topology: tpu7x:2x2x1
jax: 0.10.0
libtpu: 0.0.40
codegen_flags: <defaults>
</compile_context>

<pallas_src>
import functools

import jax
import jax.numpy as jnp
import numpy as np
from jax.experimental import pallas as pl
from jax.experimental.pallas import tpu as pltpu

STD = 0.1  # fixed policy std, as in the module (0.1 * ones(action_dim))


def _lstm_policy_kernel(obs_ref, act_ref,
                        w1_ref, b1_ref, w2_ref, b2_ref,
                        wih_ref, whh_ref, bias_ref,
                        wa_ref, ba_ref,
                        loss_ref,
                        gih_ref, h_all_ref,
                        *, emb_dim, seq_len, action_dim):
    E = emb_dim
    S = seq_len
    A = action_dim

    obs = obs_ref[...]                                      # (S, OBS_DIM)
    act = act_ref[...]                                      # (S, A)

    # ---- batched (hoisted) feed-forward parts --------------------------------
    hid = jnp.maximum(
        jnp.dot(obs, w1_ref[...], preferred_element_type=jnp.float32) + b1_ref[...],
        0.0)                                                # (S, H)
    emb = jnp.dot(hid, w2_ref[...], preferred_element_type=jnp.float32) + b2_ref[...]

    # Input contribution to all gates for every step; (b_ih + b_hh) already folded.
    gih_ref[...] = (jnp.dot(emb, wih_ref[...], preferred_element_type=jnp.float32)
                    + bias_ref[...])                        # (S, 4E)

    whh = whh_ref[...]                                      # (E, 4E), loop-invariant

    # ---- sequential LSTM recurrence (only h @ Whh + gate math per step) ------
    def step(t, carry):
        h, c = carry                                        # (1, E), (1, E)
        g = gih_ref[pl.ds(t, 1), :] + jnp.dot(
            h, whh, preferred_element_type=jnp.float32)     # (1, 4E)
        sig = jax.nn.sigmoid(g)                             # full-width EUP
        tnh = jnp.tanh(g)
        i_g = sig[:, 0:E]
        f_g = sig[:, E:2 * E]
        g_g = tnh[:, 2 * E:3 * E]
        o_g = sig[:, 3 * E:4 * E]
        c_new = f_g * c + i_g * g_g
        h_new = o_g * jnp.tanh(c_new)
        h_all_ref[pl.ds(t, 1), :] = h_new
        return (h_new, c_new)

    h0 = jnp.zeros((1, E), jnp.float32)                     # lstm_state=None -> zeros
    c0 = jnp.zeros((1, E), jnp.float32)
    jax.lax.fori_loop(0, S, step, (h0, c0), unroll=True)

    # ---- batched action head + Normal(mu, STD) NLL reduction -----------------
    mu = jnp.tanh(
        jnp.dot(h_all_ref[...], wa_ref[...], preferred_element_type=jnp.float32)
        + ba_ref[...])                                      # (S, A)
    quad = (act - mu) ** 2
    const = float(np.log(STD) + 0.5 * np.log(2.0 * np.pi))  # folded constant term
    total = jnp.sum(quad) * (1.0 / (2.0 * STD * STD)) + const * float(S * A)
    loss_ref[...] = (total / float(S * A)).reshape(1, 1)


def lstm_policy_loss(obs_traj, act_traj, params):
    """obs_traj: (T, L, OBS_DIM), act_traj: (T, L, A) -> scalar BC loss."""
    (w1, b1, w2, b2, wih, whh, bih, bhh, wa, ba) = params
    T, L, obs_dim = obs_traj.shape
    A = act_traj.shape[-1]
    E = whh.shape[0]
    S = T * L

    obs = obs_traj.reshape(S, obs_dim).astype(jnp.float32)
    act = act_traj.reshape(S, A).astype(jnp.float32)
    bias = (bih + bhh).astype(jnp.float32)                  # combined LSTM bias (1, 4E)

    kernel = functools.partial(_lstm_policy_kernel,
                               emb_dim=E, seq_len=S, action_dim=A)

    full = lambda shape: pl.BlockSpec(shape, lambda i: (0,) * len(shape))

    grid_spec = pltpu.PrefetchScalarGridSpec(
        num_scalar_prefetch=0,
        grid=(1,),                                          # single step: whole traj in VMEM
        in_specs=[
            full(obs.shape), full(act.shape),
            full(w1.shape), full(b1.shape),
            full(w2.shape), full(b2.shape),
            full(wih.shape), full(whh.shape), full(bias.shape),
            full(wa.shape), full(ba.shape),
        ],
        out_specs=pl.BlockSpec((1, 1), lambda i: (0, 0)),
        scratch_shapes=[
            pltpu.VMEM((S, 4 * E), jnp.float32),            # precomputed input-gate contributions
            pltpu.VMEM((S, E), jnp.float32),                # h for every step (for batched head)
        ],
    )

    loss = pl.pallas_call(
        kernel,
        out_shape=jax.ShapeDtypeStruct((1, 1), jnp.float32),
        grid_spec=grid_spec,
        compiler_params=pltpu.CompilerParams(
            dimension_semantics=("arbitrary",)),            # recurrence: no grid parallelism
    )(obs, act, w1, b1, w2, b2, wih, whh, bias, wa, ba)
    return loss[0, 0]


def reference_loss(obs_traj, act_traj, params):
    """Plain-JAX reference of the same forward pass (matches PyTorch semantics)."""
    (w1, b1, w2, b2, wih, whh, bih, bhh, wa, ba) = params
    E = whh.shape[0]
    obs = obs_traj.reshape(-1, obs_traj.shape[-1])
    act = act_traj.reshape(-1, act_traj.shape[-1])
    h = jnp.zeros((1, E), jnp.float32)
    c = jnp.zeros((1, E), jnp.float32)
    total = jnp.zeros((), jnp.float32)
    for s in range(obs.shape[0]):
        x = obs[s:s + 1]
        hid = jnp.maximum(x @ w1 + b1, 0.0)
        emb = hid @ w2 + b2
        g = emb @ wih + h @ whh + bih + bhh
        i_g = jax.nn.sigmoid(g[:, :E])
        f_g = jax.nn.sigmoid(g[:, E:2 * E])
        g_g = jnp.tanh(g[:, 2 * E:3 * E])
        o_g = jax.nn.sigmoid(g[:, 3 * E:])
        c = f_g * c + i_g * g_g
        h = o_g * jnp.tanh(c)
        mu = jnp.tanh(h @ wa + ba)
        a = act[s:s + 1]
        nll = (a - mu) ** 2 / (2.0 * STD * STD) + jnp.log(STD) + 0.5 * jnp.log(2.0 * jnp.pi)
        total = total + jnp.sum(nll)
    return total / (obs.shape[0] * act.shape[-1])


def init_params(key, obs_dim, mlp_hidden, emb_dim, action_dim):
    ks = jax.random.split(key, 10)
    scale = 0.1
    w1 = scale * jax.random.normal(ks[0], (obs_dim, mlp_hidden), jnp.float32)
    b1 = scale * jax.random.normal(ks[1], (1, mlp_hidden), jnp.float32)
    w2 = scale * jax.random.normal(ks[2], (mlp_hidden, emb_dim), jnp.float32)
    b2 = scale * jax.random.normal(ks[3], (1, emb_dim), jnp.float32)
    # PyTorch stores weight_ih_l0 as (4E, in); we keep pre-transposed (in, 4E).
    wih = scale * jax.random.normal(ks[4], (emb_dim, 4 * emb_dim), jnp.float32)
    whh = scale * jax.random.normal(ks[5], (emb_dim, 4 * emb_dim), jnp.float32)
    bih = scale * jax.random.normal(ks[6], (1, 4 * emb_dim), jnp.float32)
    bhh = scale * jax.random.normal(ks[7], (1, 4 * emb_dim), jnp.float32)
    wa = scale * jax.random.normal(ks[8], (emb_dim, action_dim), jnp.float32)
    ba = scale * jax.random.normal(ks[9], (1, action_dim), jnp.float32)
    return (w1, b1, w2, b2, wih, whh, bih, bhh, wa, ba)


if __name__ == "__main__":
    OBS_DIM, MLP_HIDDEN, EMB_DIM, ACTION_DIM = 16, 32, 32, 8
    T, L = 8, 2  # 8 trajectory steps, 2 rows per step (unbatched-LSTM sub-sequence)

    key = jax.random.PRNGKey(0)
    k_obs, k_act, k_par = jax.random.split(key, 3)
    obs_traj = jax.random.normal(k_obs, (T, L, OBS_DIM), jnp.float32)
    act_traj = 0.1 * jax.random.normal(k_act, (T, L, ACTION_DIM), jnp.float32)
    params = init_params(k_par, OBS_DIM, MLP_HIDDEN, EMB_DIM, ACTION_DIM)

    # TODO(synk): the PyTorch module also bundles an Adam optimizer update / (de)serialization;
    # only the forward-pass (BC NLL loss) is implemented here.
    loss = jax.block_until_ready(lstm_policy_loss(obs_traj, act_traj, params))
    ref = jax.block_until_ready(reference_loss(obs_traj, act_traj, params))

    np.testing.assert_allclose(np.asarray(loss), np.asarray(ref), rtol=5e-3, atol=5e-3)
    print("KERNEL_OK")
</pallas_src>

<mosaic_0001>
module attributes {stable_mosaic.version = 11 : i64} {
  func.func @_lstm_policy_kernel(%arg0: i32, %arg1: memref<16x16xf32, #tpu.memory_space<vmem>>, %arg2: memref<16x8xf32, #tpu.memory_space<vmem>>, %arg3: memref<16x32xf32, #tpu.memory_space<vmem>>, %arg4: memref<1x32xf32, #tpu.memory_space<vmem>>, %arg5: memref<32x32xf32, #tpu.memory_space<vmem>>, %arg6: memref<1x32xf32, #tpu.memory_space<vmem>>, %arg7: memref<32x128xf32, #tpu.memory_space<vmem>>, %arg8: memref<32x128xf32, #tpu.memory_space<vmem>>, %arg9: memref<1x128xf32, #tpu.memory_space<vmem>>, %arg10: memref<32x8xf32, #tpu.memory_space<vmem>>, %arg11: memref<1x8xf32, #tpu.memory_space<vmem>>, %arg12: memref<1x1xf32, #tpu.memory_space<vmem>>, %arg13: memref<16x128xf32, #tpu.memory_space<vmem>>, %arg14: memref<16x32xf32, #tpu.memory_space<vmem>>) attributes {dimension_semantics = [#tpu.dimension_semantics<arbitrary>], iteration_bounds = array<i64: 1>, scalar_prefetch = 0 : i64, scratch_operands = 2 : i64, tpu.core_type = #tpu.core_type<tc>, window_params = [{pipeline_mode = #tpu.pipeline_mode<synchronous>, transform_indices = @transform_0, window_bounds = array<i64: 16, 16>}, {pipeline_mode = #tpu.pipeline_mode<synchronous>, transform_indices = @transform_1, window_bounds = array<i64: 16, 8>}, {pipeline_mode = #tpu.pipeline_mode<synchronous>, transform_indices = @transform_2, window_bounds = array<i64: 16, 32>}, {pipeline_mode = #tpu.pipeline_mode<synchronous>, transform_indices = @transform_3, window_bounds = array<i64: 1, 32>}, {pipeline_mode = #tpu.pipeline_mode<synchronous>, transform_indices = @transform_4, window_bounds = array<i64: 32, 32>}, {pipeline_mode = #tpu.pipeline_mode<synchronous>, transform_indices = @transform_5, window_bounds = array<i64: 1, 32>}, {pipeline_mode = #tpu.pipeline_mode<synchronous>, transform_indices = @transform_6, window_bounds = array<i64: 32, 128>}, {pipeline_mode = #tpu.pipeline_mode<synchronous>, transform_indices = @transform_7, window_bounds = array<i64: 32, 128>}, {pipeline_mode = #tpu.pipeline_mode<synchronous>, transform_indices = @transform_8, window_bounds = array<i64: 1, 128>}, {pipeline_mode = #tpu.pipeline_mode<synchronous>, transform_indices = @transform_9, window_bounds = array<i64: 32, 8>}, {pipeline_mode = #tpu.pipeline_mode<synchronous>, transform_indices = @transform_10, window_bounds = array<i64: 1, 8>}, {pipeline_mode = #tpu.pipeline_mode<synchronous>, transform_indices = @transform_11, window_bounds = array<i64: 1, 1>}]} {
    %c0 = arith.constant 0 : index
    %c0_0 = arith.constant 0 : index
    %0 = vector.load %arg1[%c0, %c0_0] : memref<16x16xf32, #tpu.memory_space<vmem>>, vector<16x16xf32>
    %c0_1 = arith.constant 0 : index
    %c0_2 = arith.constant 0 : index
    %1 = vector.load %arg2[%c0_1, %c0_2] : memref<16x8xf32, #tpu.memory_space<vmem>>, vector<16x8xf32>
    %c0_3 = arith.constant 0 : index
    %c0_4 = arith.constant 0 : index
    %2 = vector.load %arg3[%c0_3, %c0_4] : memref<16x32xf32, #tpu.memory_space<vmem>>, vector<16x32xf32>
    %cst = arith.constant dense<0.000000e+00> : vector<16x32xf32>
    %3 = tpu.matmul %0, %2, %cst {dimension_numbers = #tpu.dot_dimension_numbers<[1], [0], [0], [1], [0, 0, 1, 1], [], []>} : vector<16x16xf32>, vector<16x32xf32>, vector<16x32xf32> -> vector<16x32xf32>
    %c0_5 = arith.constant 0 : index
    %c0_6 = arith.constant 0 : index
    %4 = vector.load %arg4[%c0_5, %c0_6] : memref<1x32xf32, #tpu.memory_space<vmem>>, vector<1x32xf32>
    %5 = vector.broadcast %4 : vector<1x32xf32> to vector<16x32xf32>
    %6 = arith.addf %3, %5 : vector<16x32xf32>
    %cst_7 = arith.constant 0.000000e+00 : f32
    %7 = vector.broadcast %cst_7 : f32 to vector<16x32xf32>
    %8 = arith.maximumf %6, %7 : vector<16x32xf32>
    %c0_8 = arith.constant 0 : index
    %c0_9 = arith.constant 0 : index
    %9 = vector.load %arg5[%c0_8, %c0_9] : memref<32x32xf32, #tpu.memory_space<vmem>>, vector<32x32xf32>
    %cst_10 = arith.constant dense<0.000000e+00> : vector<16x32xf32>
    %10 = tpu.matmul %8, %9, %cst_10 {dimension_numbers = #tpu.dot_dimension_numbers<[1], [0], [0], [1], [0, 0, 1, 1], [], []>} : vector<16x32xf32>, vector<32x32xf32>, vector<16x32xf32> -> vector<16x32xf32>
    %c0_11 = arith.constant 0 : index
    %c0_12 = arith.constant 0 : index
    %11 = vector.load %arg6[%c0_11, %c0_12] : memref<1x32xf32, #tpu.memory_space<vmem>>, vector<1x32xf32>
    %12 = vector.broadcast %11 : vector<1x32xf32> to vector<16x32xf32>
    %13 = arith.addf %10, %12 : vector<16x32xf32>
    %c0_13 = arith.constant 0 : index
    %c0_14 = arith.constant 0 : index
    %14 = vector.load %arg7[%c0_13, %c0_14] : memref<32x128xf32, #tpu.memory_space<vmem>>, vector<32x128xf32>
    %cst_15 = arith.constant dense<0.000000e+00> : vector<16x128xf32>
    %15 = tpu.matmul %13, %14, %cst_15 {dimension_numbers = #tpu.dot_dimension_numbers<[1], [0], [0], [1], [0, 0, 1, 1], [], []>} : vector<16x32xf32>, vector<32x128xf32>, vector<16x128xf32> -> vector<16x128xf32>
    %c0_16 = arith.constant 0 : index
    %c0_17 = arith.constant 0 : index
    %16 = vector.load %arg9[%c0_16, %c0_17] : memref<1x128xf32, #tpu.memory_space<vmem>>, vector<1x128xf32>
    %17 = vector.broadcast %16 : vector<1x128xf32> to vector<16x128xf32>
    %18 = arith.addf %15, %17 : vector<16x128xf32>
    %c0_18 = arith.constant 0 : index
    %c0_19 = arith.constant 0 : index
    %19 = vector.load %arg13[%c0_18, %c0_19] : memref<16x128xf32, #tpu.memory_space<vmem>>, vector<16x128xf32>
    tpu.vector_store %arg13[%c0_18, %c0_19], %18 {strides = array<i32>} : memref<16x128xf32, #tpu.memory_space<vmem>>, vector<16x128xf32>,
    %c0_20 = arith.constant 0 : index
    %c0_21 = arith.constant 0 : index
    %20 = vector.load %arg8[%c0_20, %c0_21] : memref<32x128xf32, #tpu.memory_space<vmem>>, vector<32x128xf32>
    %cst_22 = arith.constant 0.000000e+00 : f32
    %21 = vector.broadcast %cst_22 : f32 to vector<1x32xf32>
    %cst_23 = arith.constant 0.000000e+00 : f32
    %22 = vector.broadcast %cst_23 : f32 to vector<1x32xf32>
    %c0_i32 = arith.constant 0 : i32
    %23 = arith.index_cast %c0_i32 : i32 to index
    %c0_24 = arith.constant 0 : index
    %24 = vector.load %arg13[%23, %c0_24] : memref<16x128xf32, #tpu.memory_space<vmem>>, vector<1x128xf32>
    %cst_25 = arith.constant dense<0.000000e+00> : vector<1x128xf32>
    %25 = tpu.matmul %21, %20, %cst_25 {dimension_numbers = #tpu.dot_dimension_numbers<[1], [0], [0], [1], [0, 0, 1, 1], [], []>} : vector<1x32xf32>, vector<32x128xf32>, vector<1x128xf32> -> vector<1x128xf32>
    %26 = arith.addf %24, %25 : vector<1x128xf32>
    %27 = arith.negf %26 : vector<1x128xf32>
    %28 = math.exp %27 : vector<1x128xf32>
    %cst_26 = arith.constant 1.000000e+00 : f32
    %29 = vector.broadcast %cst_26 : f32 to vector<1x128xf32>
    %30 = arith.addf %29, %28 : vector<1x128xf32>
    %31 = arith.divf %29, %30 : vector<1x128xf32>
    %32 = math.tanh %26 : vector<1x128xf32>
    %33 = vector.extract_strided_slice %31 {offsets = [0, 0], sizes = [1, 32], strides = [1, 1]} : vector<1x128xf32> to vector<1x32xf32>
    %34 = vector.extract_strided_slice %31 {offsets = [0, 32], sizes = [1, 32], strides = [1, 1]} : vector<1x128xf32> to vector<1x32xf32>
    %35 = vector.extract_strided_slice %32 {offsets = [0, 64], sizes = [1, 32], strides = [1, 1]} : vector<1x128xf32> to vector<1x32xf32>
    %36 = vector.extract_strided_slice %31 {offsets = [0, 96], sizes = [1, 32], strides = [1, 1]} : vector<1x128xf32> to vector<1x32xf32>
    %37 = arith.mulf %34, %22 : vector<1x32xf32>
    %38 = arith.mulf %33, %35 : vector<1x32xf32>
    %39 = arith.addf %37, %38 : vector<1x32xf32>
    %40 = math.tanh %39 : vector<1x32xf32>
    %41 = arith.mulf %36, %40 : vector<1x32xf32>
    %42 = arith.index_cast %c0_i32 : i32 to index
    %c0_27 = arith.constant 0 : index
    %43 = vector.load %arg14[%42, %c0_27] : memref<16x32xf32, #tpu.memory_space<vmem>>, vector<1x32xf32>
    tpu.vector_store %arg14[%42, %c0_27], %41 {strides = array<i32>} : memref<16x32xf32, #tpu.memory_space<vmem>>, vector<1x32xf32>,
    %c1_i32 = arith.constant 1 : i32
    %44 = arith.index_cast %c1_i32 : i32 to index
    %c0_28 = arith.constant 0 : index
    %45 = vector.load %arg13[%44, %c0_28] : memref<16x128xf32, #tpu.memory_space<vmem>>, vector<1x128xf32>
    %cst_29 = arith.constant dense<0.000000e+00> : vector<1x128xf32>
    %46 = tpu.matmul %41, %20, %cst_29 {dimension_numbers = #tpu.dot_dimension_numbers<[1], [0], [0], [1], [0, 0, 1, 1], [], []>} : vector<1x32xf32>, vector<32x128xf32>, vector<1x128xf32> -> vector<1x128xf32>
    %47 = arith.addf %45, %46 : vector<1x128xf32>
    %48 = arith.negf %47 : vector<1x128xf32>
    %49 = math.exp %48 : vector<1x128xf32>
    %cst_30 = arith.constant 1.000000e+00 : f32
    %50 = vector.broadcast %cst_30 : f32 to vector<1x128xf32>
    %51 = arith.addf %50, %49 : vector<1x128xf32>
    %52 = arith.divf %50, %51 : vector<1x128xf32>
    %53 = math.tanh %47 : vector<1x128xf32>
    %54 = vector.extract_strided_slice %52 {offsets = [0, 0], sizes = [1, 32], strides = [1, 1]} : vector<1x128xf32> to vector<1x32xf32>
    %55 = vector.extract_strided_slice %52 {offsets = [0, 32], sizes = [1, 32], strides = [1, 1]} : vector<1x128xf32> to vector<1x32xf32>
    %56 = vector.extract_strided_slice %53 {offsets = [0, 64], sizes = [1, 32], strides = [1, 1]} : vector<1x128xf32> to vector<1x32xf32>
    %57 = vector.extract_strided_slice %52 {offsets = [0, 96], sizes = [1, 32], strides = [1, 1]} : vector<1x128xf32> to vector<1x32xf32>
    %58 = arith.mulf %55, %39 : vector<1x32xf32>
    %59 = arith.mulf %54, %56 : vector<1x32xf32>
    %60 = arith.addf %58, %59 : vector<1x32xf32>
    %61 = math.tanh %60 : vector<1x32xf32>
    %62 = arith.mulf %57, %61 : vector<1x32xf32>
    %63 = arith.index_cast %c1_i32 : i32 to index
    %c0_31 = arith.constant 0 : index
    %64 = vector.load %arg14[%63, %c0_31] : memref<16x32xf32, #tpu.memory_space<vmem>>, vector<1x32xf32>
    tpu.vector_store %arg14[%63, %c0_31], %62 {strides = array<i32>} : memref<16x32xf32, #tpu.memory_space<vmem>>, vector<1x32xf32>,
    %c2_i32 = arith.constant 2 : i32
    %65 = arith.index_cast %c2_i32 : i32 to index
    %c0_32 = arith.constant 0 : index
    %66 = vector.load %arg13[%65, %c0_32] : memref<16x128xf32, #tpu.memory_space<vmem>>, vector<1x128xf32>
    %cst_33 = arith.constant dense<0.000000e+00> : vector<1x128xf32>
    %67 = tpu.matmul %62, %20, %cst_33 {dimension_numbers = #tpu.dot_dimension_numbers<[1], [0], [0], [1], [0, 0, 1, 1], [], []>} : vector<1x32xf32>, vector<32x128xf32>, vector<1x128xf32> -> vector<1x128xf32>
    %68 = arith.addf %66, %67 : vector<1x128xf32>
    %69 = arith.negf %68 : vector<1x128xf32>
    %70 = math.exp %69 : vector<1x128xf32>
    %cst_34 = arith.constant 1.000000e+00 : f32
    %71 = vector.broadcast %cst_34 : f32 to vector<1x128xf32>
    %72 = arith.addf %71, %70 : vector<1x128xf32>
    %73 = arith.divf %71, %72 : vector<1x128xf32>
    %74 = math.tanh %68 : vector<1x128xf32>
    %75 = vector.extract_strided_slice %73 {offsets = [0, 0], sizes = [1, 32], strides = [1, 1]} : vector<1x128xf32> to vector<1x32xf32>
    %76 = vector.extract_strided_slice %73 {offsets = [0, 32], sizes = [1, 32], strides = [1, 1]} : vector<1x128xf32> to vector<1x32xf32>
    %77 = vector.extract_strided_slice %74 {offsets = [0, 64], sizes = [1, 32], strides = [1, 1]} : vector<1x128xf32> to vector<1x32xf32>
    %78 = vector.extract_strided_slice %73 {offsets = [0, 96], sizes = [1, 32], strides = [1, 1]} : vector<1x128xf32> to vector<1x32xf32>
    %79 = arith.mulf %76, %60 : vector<1x32xf32>
    %80 = arith.mulf %75, %77 : vector<1x32xf32>
    %81 = arith.addf %79, %80 : vector<1x32xf32>
    %82 = math.tanh %81 : vector<1x32xf32>
    %83 = arith.mulf %78, %82 : vector<1x32xf32>
    %84 = arith.index_cast %c2_i32 : i32 to index
    %c0_35 = arith.constant 0 : index
    %85 = vector.load %arg14[%84, %c0_35] : memref<16x32xf32, #tpu.memory_space<vmem>>, vector<1x32xf32>
    tpu.vector_store %arg14[%84, %c0_35], %83 {strides = array<i32>} : memref<16x32xf32, #tpu.memory_space<vmem>>, vector<1x32xf32>,
    %c3_i32 = arith.constant 3 : i32
    %86 = arith.index_cast %c3_i32 : i32 to index
    %c0_36 = arith.constant 0 : index
    %87 = vector.load %arg13[%86, %c0_36] : memref<16x128xf32, #tpu.memory_space<vmem>>, vector<1x128xf32>
    %cst_37 = arith.constant dense<0.000000e+00> : vector<1x128xf32>
    %88 = tpu.matmul %83, %20, %cst_37 {dimension_numbers = #tpu.dot_dimension_numbers<[1], [0], [0], [1], [0, 0, 1, 1], [], []>} : vector<1x32xf32>, vector<32x128xf32>, vector<1x128xf32> -> vector<1x128xf32>
    %89 = arith.addf %87, %88 : vector<1x128xf32>
    %90 = arith.negf %89 : vector<1x128xf32>
    %91 = math.exp %90 : vector<1x128xf32>
    %cst_38 = arith.constant 1.000000e+00 : f32
    %92 = vector.broadcast %cst_38 : f32 to vector<1x128xf32>
    %93 = arith.addf %92, %91 : vector<1x128xf32>
    %94 = arith.divf %92, %93 : vector<1x128xf32>
    %95 = math.tanh %89 : vector<1x128xf32>
    %96 = vector.extract_strided_slice %94 {offsets = [0, 0], sizes = [1, 32], strides = [1, 1]} : vector<1x128xf32> to vector<1x32xf32>
    %97 = vector.extract_strided_slice %94 {offsets = [0, 32], sizes = [1, 32], strides = [1, 1]} : vector<1x128xf32> to vector<1x32xf32>
    %98 = vector.extract_strided_slice %95 {offsets = [0, 64], sizes = [1, 32], strides = [1, 1]} : vector<1x128xf32> to vector<1x32xf32>
    %99 = vector.extract_strided_slice %94 {offsets = [0, 96], sizes = [1, 32], strides = [1, 1]} : vector<1x128xf32> to vector<1x32xf32>
    %100 = arith.mulf %97, %81 : vector<1x32xf32>
    %101 = arith.mulf %96, %98 : vector<1x32xf32>
    %102 = arith.addf %100, %101 : vector<1x32xf32>
    %103 = math.tanh %102 : vector<1x32xf32>
    %104 = arith.mulf %99, %103 : vector<1x32xf32>
    %105 = arith.index_cast %c3_i32 : i32 to index
    %c0_39 = arith.constant 0 : index
    %106 = vector.load %arg14[%105, %c0_39] : memref<16x32xf32, #tpu.memory_space<vmem>>, vector<1x32xf32>
    tpu.vector_store %arg14[%105, %c0_39], %104 {strides = array<i32>} : memref<16x32xf32, #tpu.memory_space<vmem>>, vector<1x32xf32>,
    %c4_i32 = arith.constant 4 : i32
    %107 = arith.index_cast %c4_i32 : i32 to index
    %c0_40 = arith.constant 0 : index
    %108 = vector.load %arg13[%107, %c0_40] : memref<16x128xf32, #tpu.memory_space<vmem>>, vector<1x128xf32>
    %cst_41 = arith.constant dense<0.000000e+00> : vector<1x128xf32>
    %109 = tpu.matmul %104, %20, %cst_41 {dimension_numbers = #tpu.dot_dimension_numbers<[1], [0], [0], [1], [0, 0, 1, 1], [], []>} : vector<1x32xf32>, vector<32x128xf32>, vector<1x128xf32> -> vector<1x128xf32>
    %110 = arith.addf %108, %109 : vector<1x128xf32>
    %111 = arith.negf %110 : vector<1x128xf32>
    %112 = math.exp %111 : vector<1x128xf32>
    %cst_42 = arith.constant 1.000000e+00 : f32
    %113 = vector.broadcast %cst_42 : f32 to vector<1x128xf32>
    %114 = arith.addf %113, %112 : vector<1x128xf32>
    %115 = arith.divf %113, %114 : vector<1x128xf32>
    %116 = math.tanh %110 : vector<1x128xf32>
    %117 = vector.extract_strided_slice %115 {offsets = [0, 0], sizes = [1, 32], strides = [1, 1]} : vector<1x128xf32> to vector<1x32xf32>
    %118 = vector.extract_strided_slice %115 {offsets = [0, 32], sizes = [1, 32], strides = [1, 1]} : vector<1x128xf32> to vector<1x32xf32>
    %119 = vector.extract_strided_slice %116 {offsets = [0, 64], sizes = [1, 32], strides = [1, 1]} : vector<1x128xf32> to vector<1x32xf32>
    %120 = vector.extract_strided_slice %115 {offsets = [0, 96], sizes = [1, 32], strides = [1, 1]} : vector<1x128xf32> to vector<1x32xf32>
    %121 = arith.mulf %118, %102 : vector<1x32xf32>
    %122 = arith.mulf %117, %119 : vector<1x32xf32>
    %123 = arith.addf %121, %122 : vector<1x32xf32>
    %124 = math.tanh %123 : vector<1x32xf32>
    %125 = arith.mulf %120, %124 : vector<1x32xf32>
    %126 = arith.index_cast %c4_i32 : i32 to index
    %c0_43 = arith.constant 0 : index
    %127 = vector.load %arg14[%126, %c0_43] : memref<16x32xf32, #tpu.memory_space<vmem>>, vector<1x32xf32>
    tpu.vector_store %arg14[%126, %c0_43], %125 {strides = array<i32>} : memref<16x32xf32, #tpu.memory_space<vmem>>, vector<1x32xf32>,
    %c5_i32 = arith.constant 5 : i32
    %128 = arith.index_cast %c5_i32 : i32 to index
    %c0_44 = arith.constant 0 : index
    %129 = vector.load %arg13[%128, %c0_44] : memref<16x128xf32, #tpu.memory_space<vmem>>, vector<1x128xf32>
    %cst_45 = arith.constant dense<0.000000e+00> : vector<1x128xf32>
    %130 = tpu.matmul %125, %20, %cst_45 {dimension_numbers = #tpu.dot_dimension_numbers<[1], [0], [0], [1], [0, 0, 1, 1], [], []>} : vector<1x32xf32>, vector<32x128xf32>, vector<1x128xf32> -> vector<1x128xf32>
    %131 = arith.addf %129, %130 : vector<1x128xf32>
    %132 = arith.negf %131 : vector<1x128xf32>
    %133 = math.exp %132 : vector<1x128xf32>
    %cst_46 = arith.constant 1.000000e+00 : f32
    %134 = vector.broadcast %cst_46 : f32 to vector<1x128xf32>
    %135 = arith.addf %134, %133 : vector<1x128xf32>
    %136 = arith.divf %134, %135 : vector<1x128xf32>
    %137 = math.tanh %131 : vector<1x128xf32>
    %138 = vector.extract_strided_slice %136 {offsets = [0, 0], sizes = [1, 32], strides = [1, 1]} : vector<1x128xf32> to vector<1x32xf32>
    %139 = vector.extract_strided_slice %136 {offsets = [0, 32], sizes = [1, 32], strides = [1, 1]} : vector<1x128xf32> to vector<1x32xf32>
    %140 = vector.extract_strided_slice %137 {offsets = [0, 64], sizes = [1, 32], strides = [1, 1]} : vector<1x128xf32> to vector<1x32xf32>
    %141 = vector.extract_strided_slice %136 {offsets = [0, 96], sizes = [1, 32], strides = [1, 1]} : vector<1x128xf32> to vector<1x32xf32>
    %142 = arith.mulf %139, %123 : vector<1x32xf32>
    %143 = arith.mulf %138, %140 : vector<1x32xf32>
    %144 = arith.addf %142, %143 : vector<1x32xf32>
    %145 = math.tanh %144 : vector<1x32xf32>
    %146 = arith.mulf %141, %145 : vector<1x32xf32>
    %147 = arith.index_cast %c5_i32 : i32 to index
    %c0_47 = arith.constant 0 : index
    %148 = vector.load %arg14[%147, %c0_47] : memref<16x32xf32, #tpu.memory_space<vmem>>, vector<1x32xf32>
    tpu.vector_store %arg14[%147, %c0_47], %146 {strides = array<i32>} : memref<16x32xf32, #tpu.memory_space<vmem>>, vector<1x32xf32>,
    %c6_i32 = arith.constant 6 : i32
    %149 = arith.index_cast %c6_i32 : i32 to index
    %c0_48 = arith.constant 0 : index
    %150 = vector.load %arg13[%149, %c0_48] : memref<16x128xf32, #tpu.memory_space<vmem>>, vector<1x128xf32>
    %cst_49 = arith.constant dense<0.000000e+00> : vector<1x128xf32>
    %151 = tpu.matmul %146, %20, %cst_49 {dimension_numbers = #tpu.dot_dimension_numbers<[1], [0], [0], [1], [0, 0, 1, 1], [], []>} : vector<1x32xf32>, vector<32x128xf32>, vector<1x128xf32> -> vector<1x128xf32>
    %152 = arith.addf %150, %151 : vector<1x128xf32>
    %153 = arith.negf %152 : vector<1x128xf32>
    %154 = math.exp %153 : vector<1x128xf32>
    %cst_50 = arith.constant 1.000000e+00 : f32
    %155 = vector.broadcast %cst_50 : f32 to vector<1x128xf32>
    %156 = arith.addf %155, %154 : vector<1x128xf32>
    %157 = arith.divf %155, %156 : vector<1x128xf32>
    %158 = math.tanh %152 : vector<1x128xf32>
    %159 = vector.extract_strided_slice %157 {offsets = [0, 0], sizes = [1, 32], strides = [1, 1]} : vector<1x128xf32> to vector<1x32xf32>
    %160 = vector.extract_strided_slice %157 {offsets = [0, 32], sizes = [1, 32], strides = [1, 1]} : vector<1x128xf32> to vector<1x32xf32>
    %161 = vector.extract_strided_slice %158 {offsets = [0, 64], sizes = [1, 32], strides = [1, 1]} : vector<1x128xf32> to vector<1x32xf32>
    %162 = vector.extract_strided_slice %157 {offsets = [0, 96], sizes = [1, 32], strides = [1, 1]} : vector<1x128xf32> to vector<1x32xf32>
    %163 = arith.mulf %160, %144 : vector<1x32xf32>
    %164 = arith.mulf %159, %161 : vector<1x32xf32>
    %165 = arith.addf %163, %164 : vector<1x32xf32>
    %166 = math.tanh %165 : vector<1x32xf32>
    %167 = arith.mulf %162, %166 : vector<1x32xf32>
    %168 = arith.index_cast %c6_i32 : i32 to index
    %c0_51 = arith.constant 0 : index
    %169 = vector.load %arg14[%168, %c0_51] : memref<16x32xf32, #tpu.memory_space<vmem>>, vector<1x32xf32>
    tpu.vector_store %arg14[%168, %c0_51], %167 {strides = array<i32>} : memref<16x32xf32, #tpu.memory_space<vmem>>, vector<1x32xf32>,
    %c7_i32 = arith.constant 7 : i32
    %170 = arith.index_cast %c7_i32 : i32 to index
    %c0_52 = arith.constant 0 : index
    %171 = vector.load %arg13[%170, %c0_52] : memref<16x128xf32, #tpu.memory_space<vmem>>, vector<1x128xf32>
    %cst_53 = arith.constant dense<0.000000e+00> : vector<1x128xf32>
    %172 = tpu.matmul %167, %20, %cst_53 {dimension_numbers = #tpu.dot_dimension_numbers<[1], [0], [0], [1], [0, 0, 1, 1], [], []>} : vector<1x32xf32>, vector<32x128xf32>, vector<1x128xf32> -> vector<1x128xf32>
    %173 = arith.addf %171, %172 : vector<1x128xf32>
    %174 = arith.negf %173 : vector<1x128xf32>
    %175 = math.exp %174 : vector<1x128xf32>
    %cst_54 = arith.constant 1.000000e+00 : f32
    %176 = vector.broadcast %cst_54 : f32 to vector<1x128xf32>
    %177 = arith.addf %176, %175 : vector<1x128xf32>
    %178 = arith.divf %176, %177 : vector<1x128xf32>
    %179 = math.tanh %173 : vector<1x128xf32>
    %180 = vector.extract_strided_slice %178 {offsets = [0, 0], sizes = [1, 32], strides = [1, 1]} : vector<1x128xf32> to vector<1x32xf32>
    %181 = vector.extract_strided_slice %178 {offsets = [0, 32], sizes = [1, 32], strides = [1, 1]} : vector<1x128xf32> to vector<1x32xf32>
    %182 = vector.extract_strided_slice %179 {offsets = [0, 64], sizes = [1, 32], strides = [1, 1]} : vector<1x128xf32> to vector<1x32xf32>
    %183 = vector.extract_strided_slice %178 {offsets = [0, 96], sizes = [1, 32], strides = [1, 1]} : vector<1x128xf32> to vector<1x32xf32>
    %184 = arith.mulf %181, %165 : vector<1x32xf32>
    %185 = arith.mulf %180, %182 : vector<1x32xf32>
    %186 = arith.addf %184, %185 : vector<1x32xf32>
    %187 = math.tanh %186 : vector<1x32xf32>
    %188 = arith.mulf %183, %187 : vector<1x32xf32>
    %189 = arith.index_cast %c7_i32 : i32 to index
    %c0_55 = arith.constant 0 : index
    %190 = vector.load %arg14[%189, %c0_55] : memref<16x32xf32, #tpu.memory_space<vmem>>, vector<1x32xf32>
    tpu.vector_store %arg14[%189, %c0_55], %188 {strides = array<i32>} : memref<16x32xf32, #tpu.memory_space<vmem>>, vector<1x32xf32>,
    %c8_i32 = arith.constant 8 : i32
    %191 = arith.index_cast %c8_i32 : i32 to index
    %c0_56 = arith.constant 0 : index
    %192 = vector.load %arg13[%191, %c0_56] : memref<16x128xf32, #tpu.memory_space<vmem>>, vector<1x128xf32>
    %cst_57 = arith.constant dense<0.000000e+00> : vector<1x128xf32>
    %193 = tpu.matmul %188, %20, %cst_57 {dimension_numbers = #tpu.dot_dimension_numbers<[1], [0], [0], [1], [0, 0, 1, 1], [], []>} : vector<1x32xf32>, vector<32x128xf32>, vector<1x128xf32> -> vector<1x128xf32>
    %194 = arith.addf %192, %193 : vector<1x128xf32>
    %195 = arith.negf %194 : vector<1x128xf32>
    %196 = math.exp %195 : vector<1x128xf32>
    %cst_58 = arith.constant 1.000000e+00 : f32
    %197 = vector.broadcast %cst_58 : f32 to vector<1x128xf32>
    %198 = arith.addf %197, %196 : vector<1x128xf32>
    %199 = arith.divf %197, %198 : vector<1x128xf32>
    %200 = math.tanh %194 : vector<1x128xf32>
    %201 = vector.extract_strided_slice %199 {offsets = [0, 0], sizes = [1, 32], strides = [1, 1]} : vector<1x128xf32> to vector<1x32xf32>
    %202 = vector.extract_strided_slice %199 {offsets = [0, 32], sizes = [1, 32], strides = [1, 1]} : vector<1x128xf32> to vector<1x32xf32>
    %203 = vector.extract_strided_slice %200 {offsets = [0, 64], sizes = [1, 32], strides = [1, 1]} : vector<1x128xf32> to vector<1x32xf32>
    %204 = vector.extract_strided_slice %199 {offsets = [0, 96], sizes = [1, 32], strides = [1, 1]} : vector<1x128xf32> to vector<1x32xf32>
    %205 = arith.mulf %202, %186 : vector<1x32xf32>
    %206 = arith.mulf %201, %203 : vector<1x32xf32>
    %207 = arith.addf %205, %206 : vector<1x32xf32>
    %208 = math.tanh %207 : vector<1x32xf32>
    %209 = arith.mulf %204, %208 : vector<1x32xf32>
    %210 = arith.index_cast %c8_i32 : i32 to index
    %c0_59 = arith.constant 0 : index
    %211 = vector.load %arg14[%210, %c0_59] : memref<16x32xf32, #tpu.memory_space<vmem>>, vector<1x32xf32>
    tpu.vector_store %arg14[%210, %c0_59], %209 {strides = array<i32>} : memref<16x32xf32, #tpu.memory_space<vmem>>, vector<1x32xf32>,
    %c9_i32 = arith.constant 9 : i32
    %212 = arith.index_cast %c9_i32 : i32 to index
    %c0_60 = arith.constant 0 : index
    %213 = vector.load %arg13[%212, %c0_60] : memref<16x128xf32, #tpu.memory_space<vmem>>, vector<1x128xf32>
    %cst_61 = arith.constant dense<0.000000e+00> : vector<1x128xf32>
    %214 = tpu.matmul %209, %20, %cst_61 {dimension_numbers = #tpu.dot_dimension_numbers<[1], [0], [0], [1], [0, 0, 1, 1], [], []>} : vector<1x32xf32>, vector<32x128xf32>, vector<1x128xf32> -> vector<1x128xf32>
    %215 = arith.addf %213, %214 : vector<1x128xf32>
    %216 = arith.negf %215 : vector<1x128xf32>
    %217 = math.exp %216 : vector<1x128xf32>
    %cst_62 = arith.constant 1.000000e+00 : f32
    %218 = vector.broadcast %cst_62 : f32 to vector<1x128xf32>
    %219 = arith.addf %218, %217 : vector<1x128xf32>
    %220 = arith.divf %218, %219 : vector<1x128xf32>
    %221 = math.tanh %215 : vector<1x128xf32>
    %222 = vector.extract_strided_slice %220 {offsets = [0, 0], sizes = [1, 32], strides = [1, 1]} : vector<1x128xf32> to vector<1x32xf32>
    %223 = vector.extract_strided_slice %220 {offsets = [0, 32], sizes = [1, 32], strides = [1, 1]} : vector<1x128xf32> to vector<1x32xf32>
    %224 = vector.extract_strided_slice %221 {offsets = [0, 64], sizes = [1, 32], strides = [1, 1]} : vector<1x128xf32> to vector<1x32xf32>
    %225 = vector.extract_strided_slice %220 {offsets = [0, 96], sizes = [1, 32], strides = [1, 1]} : vector<1x128xf32> to vector<1x32xf32>
    %226 = arith.mulf %223, %207 : vector<1x32xf32>
    %227 = arith.mulf %222, %224 : vector<1x32xf32>
    %228 = arith.addf %226, %227 : vector<1x32xf32>
    %229 = math.tanh %228 : vector<1x32xf32>
    %230 = arith.mulf %225, %229 : vector<1x32xf32>
    %231 = arith.index_cast %c9_i32 : i32 to index
    %c0_63 = arith.constant 0 : index
    %232 = vector.load %arg14[%231, %c0_63] : memref<16x32xf32, #tpu.memory_space<vmem>>, vector<1x32xf32>
    tpu.vector_store %arg14[%231, %c0_63], %230 {strides = array<i32>} : memref<16x32xf32, #tpu.memory_space<vmem>>, vector<1x32xf32>,
    %c10_i32 = arith.constant 10 : i32
    %233 = arith.index_cast %c10_i32 : i32 to index
    %c0_64 = arith.constant 0 : index
    %234 = vector.load %arg13[%233, %c0_64] : memref<16x128xf32, #tpu.memory_space<vmem>>, vector<1x128xf32>
    %cst_65 = arith.constant dense<0.000000e+00> : vector<1x128xf32>
    %235 = tpu.matmul %230, %20, %cst_65 {dimension_numbers = #tpu.dot_dimension_numbers<[1], [0], [0], [1], [0, 0, 1, 1], [], []>} : vector<1x32xf32>, vector<32x128xf32>, vector<1x128xf32> -> vector<1x128xf32>
    %236 = arith.addf %234, %235 : vector<1x128xf32>
    %237 = arith.negf %236 : vector<1x128xf32>
    %238 = math.exp %237 : vector<1x128xf32>
    %cst_66 = arith.constant 1.000000e+00 : f32
    %239 = vector.broadcast %cst_66 : f32 to vector<1x128xf32>
    %240 = arith.addf %239, %238 : vector<1x128xf32>
    %241 = arith.divf %239, %240 : vector<1x128xf32>
    %242 = math.tanh %236 : vector<1x128xf32>
    %243 = vector.extract_strided_slice %241 {offsets = [0, 0], sizes = [1, 32], strides = [1, 1]} : vector<1x128xf32> to vector<1x32xf32>
    %244 = vector.extract_strided_slice %241 {offsets = [0, 32], sizes = [1, 32], strides = [1, 1]} : vector<1x128xf32> to vector<1x32xf32>
    %245 = vector.extract_strided_slice %242 {offsets = [0, 64], sizes = [1, 32], strides = [1, 1]} : vector<1x128xf32> to vector<1x32xf32>
    %246 = vector.extract_strided_slice %241 {offsets = [0, 96], sizes = [1, 32], strides = [1, 1]} : vector<1x128xf32> to vector<1x32xf32>
    %247 = arith.mulf %244, %228 : vector<1x32xf32>
    %248 = arith.mulf %243, %245 : vector<1x32xf32>
    %249 = arith.addf %247, %248 : vector<1x32xf32>
    %250 = math.tanh %249 : vector<1x32xf32>
    %251 = arith.mulf %246, %250 : vector<1x32xf32>
    %252 = arith.index_cast %c10_i32 : i32 to index
    %c0_67 = arith.constant 0 : index
    %253 = vector.load %arg14[%252, %c0_67] : memref<16x32xf32, #tpu.memory_space<vmem>>, vector<1x32xf32>
    tpu.vector_store %arg14[%252, %c0_67], %251 {strides = array<i32>} : memref<16x32xf32, #tpu.memory_space<vmem>>, vector<1x32xf32>,
    %c11_i32 = arith.constant 11 : i32
    %254 = arith.index_cast %c11_i32 : i32 to index
    %c0_68 = arith.constant 0 : index
    %255 = vector.load %arg13[%254, %c0_68] : memref<16x128xf32, #tpu.memory_space<vmem>>, vector<1x128xf32>
    %cst_69 = arith.constant dense<0.000000e+00> : vector<1x128xf32>
    %256 = tpu.matmul %251, %20, %cst_69 {dimension_numbers = #tpu.dot_dimension_numbers<[1], [0], [0], [1], [0, 0, 1, 1], [], []>} : vector<1x32xf32>, vector<32x128xf32>, vector<1x128xf32> -> vector<1x128xf32>
    %257 = arith.addf %255, %256 : vector<1x128xf32>
    %258 = arith.negf %257 : vector<1x128xf32>
    %259 = math.exp %258 : vector<1x128xf32>
    %cst_70 = arith.constant 1.000000e+00 : f32
    %260 = vector.broadcast %cst_70 : f32 to vector<1x128xf32>
    %261 = arith.addf %260, %259 : vector<1x128xf32>
    %262 = arith.divf %260, %261 : vector<1x128xf32>
    %263 = math.tanh %257 : vector<1x128xf32>
    %264 = vector.extract_strided_slice %262 {offsets = [0, 0], sizes = [1, 32], strides = [1, 1]} : vector<1x128xf32> to vector<1x32xf32>
    %265 = vector.extract_strided_slice %262 {offsets = [0, 32], sizes = [1, 32], strides = [1, 1]} : vector<1x128xf32> to vector<1x32xf32>
    %266 = vector.extract_strided_slice %263 {offsets = [0, 64], sizes = [1, 32], strides = [1, 1]} : vector<1x128xf32> to vector<1x32xf32>
    %267 = vector.extract_strided_slice %262 {offsets = [0, 96], sizes = [1, 32], strides = [1, 1]} : vector<1x128xf32> to vector<1x32xf32>
    %268 = arith.mulf %265, %249 : vector<1x32xf32>
    %269 = arith.mulf %264, %266 : vector<1x32xf32>
    %270 = arith.addf %268, %269 : vector<1x32xf32>
    %271 = math.tanh %270 : vector<1x32xf32>
    %272 = arith.mulf %267, %271 : vector<1x32xf32>
    %273 = arith.index_cast %c11_i32 : i32 to index
    %c0_71 = arith.constant 0 : index
    %274 = vector.load %arg14[%273, %c0_71] : memref<16x32xf32, #tpu.memory_space<vmem>>, vector<1x32xf32>
    tpu.vector_store %arg14[%273, %c0_71], %272 {strides = array<i32>} : memref<16x32xf32, #tpu.memory_space<vmem>>, vector<1x32xf32>,
    %c12_i32 = arith.constant 12 : i32
    %275 = arith.index_cast %c12_i32 : i32 to index
    %c0_72 = arith.constant 0 : index
    %276 = vector.load %arg13[%275, %c0_72] : memref<16x128xf32, #tpu.memory_space<vmem>>, vector<1x128xf32>
    %cst_73 = arith.constant dense<0.000000e+00> : vector<1x128xf32>
    %277 = tpu.matmul %272, %20, %cst_73 {dimension_numbers = #tpu.dot_dimension_numbers<[1], [0], [0], [1], [0, 0, 1, 1], [], []>} : vector<1x32xf32>, vector<32x128xf32>, vector<1x128xf32> -> vector<1x128xf32>
    %278 = arith.addf %276, %277 : vector<1x128xf32>
    %279 = arith.negf %278 : vector<1x128xf32>
    %280 = math.exp %279 : vector<1x128xf32>
    %cst_74 = arith.constant 1.000000e+00 : f32
    %281 = vector.broadcast %cst_74 : f32 to vector<1x128xf32>
    %282 = arith.addf %281, %280 : vector<1x128xf32>
    %283 = arith.divf %281, %282 : vector<1x128xf32>
    %284 = math.tanh %278 : vector<1x128xf32>
    %285 = vector.extract_strided_slice %283 {offsets = [0, 0], sizes = [1, 32], strides = [1, 1]} : vector<1x128xf32> to vector<1x32xf32>
    %286 = vector.extract_strided_slice %283 {offsets = [0, 32], sizes = [1, 32], strides = [1, 1]} : vector<1x128xf32> to vector<1x32xf32>
    %287 = vector.extract_strided_slice %284 {offsets = [0, 64], sizes = [1, 32], strides = [1, 1]} : vector<1x128xf32> to vector<1x32xf32>
    %288 = vector.extract_strided_slice %283 {offsets = [0, 96], sizes = [1, 32], strides = [1, 1]} : vector<1x128xf32> to vector<1x32xf32>
    %289 = arith.mulf %286, %270 : vector<1x32xf32>
    %290 = arith.mulf %285, %287 : vector<1x32xf32>
    %291 = arith.addf %289, %290 : vector<1x32xf32>
    %292 = math.tanh %291 : vector<1x32xf32>
    %293 = arith.mulf %288, %292 : vector<1x32xf32>
    %294 = arith.index_cast %c12_i32 : i32 to index
    %c0_75 = arith.constant 0 : index
    %295 = vector.load %arg14[%294, %c0_75] : memref<16x32xf32, #tpu.memory_space<vmem>>, vector<1x32xf32>
    tpu.vector_store %arg14[%294, %c0_75], %293 {strides = array<i32>} : memref<16x32xf32, #tpu.memory_space<vmem>>, vector<1x32xf32>,
    %c13_i32 = arith.constant 13 : i32
    %296 = arith.index_cast %c13_i32 : i32 to index
    %c0_76 = arith.constant 0 : index
    %297 = vector.load %arg13[%296, %c0_76] : memref<16x128xf32, #tpu.memory_space<vmem>>, vector<1x128xf32>
    %cst_77 = arith.constant dense<0.000000e+00> : vector<1x128xf32>
    %298 = tpu.matmul %293, %20, %cst_77 {dimension_numbers = #tpu.dot_dimension_numbers<[1], [0], [0], [1], [0, 0, 1, 1], [], []>} : vector<1x32xf32>, vector<32x128xf32>, vector<1x128xf32> -> vector<1x128xf32>
    %299 = arith.addf %297, %298 : vector<1x128xf32>
    %300 = arith.negf %299 : vector<1x128xf32>
    %301 = math.exp %300 : vector<1x128xf32>
    %cst_78 = arith.constant 1.000000e+00 : f32
    %302 = vector.broadcast %cst_78 : f32 to vector<1x128xf32>
    %303 = arith.addf %302, %301 : vector<1x128xf32>
    %304 = arith.divf %302, %303 : vector<1x128xf32>
    %305 = math.tanh %299 : vector<1x128xf32>
    %306 = vector.extract_strided_slice %304 {offsets = [0, 0], sizes = [1, 32], strides = [1, 1]} : vector<1x128xf32> to vector<1x32xf32>
    %307 = vector.extract_strided_slice %304 {offsets = [0, 32], sizes = [1, 32], strides = [1, 1]} : vector<1x128xf32> to vector<1x32xf32>
    %308 = vector.extract_strided_slice %305 {offsets = [0, 64], sizes = [1, 32], strides = [1, 1]} : vector<1x128xf32> to vector<1x32xf32>
    %309 = vector.extract_strided_slice %304 {offsets = [0, 96], sizes = [1, 32], strides = [1, 1]} : vector<1x128xf32> to vector<1x32xf32>
    %310 = arith.mulf %307, %291 : vector<1x32xf32>
    %311 = arith.mulf %306, %308 : vector<1x32xf32>
    %312 = arith.addf %310, %311 : vector<1x32xf32>
    %313 = math.tanh %312 : vector<1x32xf32>
    %314 = arith.mulf %309, %313 : vector<1x32xf32>
    %315 = arith.index_cast %c13_i32 : i32 to index
    %c0_79 = arith.constant 0 : index
    %316 = vector.load %arg14[%315, %c0_79] : memref<16x32xf32, #tpu.memory_space<vmem>>, vector<1x32xf32>
    tpu.vector_store %arg14[%315, %c0_79], %314 {strides = array<i32>} : memref<16x32xf32, #tpu.memory_space<vmem>>, vector<1x32xf32>,
    %c14_i32 = arith.constant 14 : i32
    %317 = arith.index_cast %c14_i32 : i32 to index
    %c0_80 = arith.constant 0 : index
    %318 = vector.load %arg13[%317, %c0_80] : memref<16x128xf32, #tpu.memory_space<vmem>>, vector<1x128xf32>
    %cst_81 = arith.constant dense<0.000000e+00> : vector<1x128xf32>
    %319 = tpu.matmul %314, %20, %cst_81 {dimension_numbers = #tpu.dot_dimension_numbers<[1], [0], [0], [1], [0, 0, 1, 1], [], []>} : vector<1x32xf32>, vector<32x128xf32>, vector<1x128xf32> -> vector<1x128xf32>
    %320 = arith.addf %318, %319 : vector<1x128xf32>
    %321 = arith.negf %320 : vector<1x128xf32>
    %322 = math.exp %321 : vector<1x128xf32>
    %cst_82 = arith.constant 1.000000e+00 : f32
    %323 = vector.broadcast %cst_82 : f32 to vector<1x128xf32>
    %324 = arith.addf %323, %322 : vector<1x128xf32>
    %325 = arith.divf %323, %324 : vector<1x128xf32>
    %326 = math.tanh %320 : vector<1x128xf32>
    %327 = vector.extract_strided_slice %325 {offsets = [0, 0], sizes = [1, 32], strides = [1, 1]} : vector<1x128xf32> to vector<1x32xf32>
    %328 = vector.extract_strided_slice %325 {offsets = [0, 32], sizes = [1, 32], strides = [1, 1]} : vector<1x128xf32> to vector<1x32xf32>
    %329 = vector.extract_strided_slice %326 {offsets = [0, 64], sizes = [1, 32], strides = [1, 1]} : vector<1x128xf32> to vector<1x32xf32>
    %330 = vector.extract_strided_slice %325 {offsets = [0, 96], sizes = [1, 32], strides = [1, 1]} : vector<1x128xf32> to vector<1x32xf32>
    %331 = arith.mulf %328, %312 : vector<1x32xf32>
    %332 = arith.mulf %327, %329 : vector<1x32xf32>
    %333 = arith.addf %331, %332 : vector<1x32xf32>
    %334 = math.tanh %333 : vector<1x32xf32>
    %335 = arith.mulf %330, %334 : vector<1x32xf32>
    %336 = arith.index_cast %c14_i32 : i32 to index
    %c0_83 = arith.constant 0 : index
    %337 = vector.load %arg14[%336, %c0_83] : memref<16x32xf32, #tpu.memory_space<vmem>>, vector<1x32xf32>
    tpu.vector_store %arg14[%336, %c0_83], %335 {strides = array<i32>} : memref<16x32xf32, #tpu.memory_space<vmem>>, vector<1x32xf32>,
    %c15_i32 = arith.constant 15 : i32
    %338 = arith.index_cast %c15_i32 : i32 to index
    %c0_84 = arith.constant 0 : index
    %339 = vector.load %arg13[%338, %c0_84] : memref<16x128xf32, #tpu.memory_space<vmem>>, vector<1x128xf32>
    %cst_85 = arith.constant dense<0.000000e+00> : vector<1x128xf32>
    %340 = tpu.matmul %335, %20, %cst_85 {dimension_numbers = #tpu.dot_dimension_numbers<[1], [0], [0], [1], [0, 0, 1, 1], [], []>} : vector<1x32xf32>, vector<32x128xf32>, vector<1x128xf32> -> vector<1x128xf32>
    %341 = arith.addf %339, %340 : vector<1x128xf32>
    %342 = arith.negf %341 : vector<1x128xf32>
    %343 = math.exp %342 : vector<1x128xf32>
    %cst_86 = arith.constant 1.000000e+00 : f32
    %344 = vector.broadcast %cst_86 : f32 to vector<1x128xf32>
    %345 = arith.addf %344, %343 : vector<1x128xf32>
    %346 = arith.divf %344, %345 : vector<1x128xf32>
    %347 = math.tanh %341 : vector<1x128xf32>
    %348 = vector.extract_strided_slice %346 {offsets = [0, 0], sizes = [1, 32], strides = [1, 1]} : vector<1x128xf32> to vector<1x32xf32>
    %349 = vector.extract_strided_slice %346 {offsets = [0, 32], sizes = [1, 32], strides = [1, 1]} : vector<1x128xf32> to vector<1x32xf32>
    %350 = vector.extract_strided_slice %347 {offsets = [0, 64], sizes = [1, 32], strides = [1, 1]} : vector<1x128xf32> to vector<1x32xf32>
    %351 = vector.extract_strided_slice %346 {offsets = [0, 96], sizes = [1, 32], strides = [1, 1]} : vector<1x128xf32> to vector<1x32xf32>
    %352 = arith.mulf %349, %333 : vector<1x32xf32>
    %353 = arith.mulf %348, %350 : vector<1x32xf32>
    %354 = arith.addf %352, %353 : vector<1x32xf32>
    %355 = math.tanh %354 : vector<1x32xf32>
    %356 = arith.mulf %351, %355 : vector<1x32xf32>
    %357 = arith.index_cast %c15_i32 : i32 to index
    %c0_87 = arith.constant 0 : index
    %358 = vector.load %arg14[%357, %c0_87] : memref<16x32xf32, #tpu.memory_space<vmem>>, vector<1x32xf32>
    tpu.vector_store %arg14[%357, %c0_87], %356 {strides = array<i32>} : memref<16x32xf32, #tpu.memory_space<vmem>>, vector<1x32xf32>,
    %c16_i32 = arith.constant 16 : i32
    %c0_88 = arith.constant 0 : index
    %c0_89 = arith.constant 0 : index
    %359 = vector.load %arg14[%c0_88, %c0_89] : memref<16x32xf32, #tpu.memory_space<vmem>>, vector<16x32xf32>
    %c0_90 = arith.constant 0 : index
    %c0_91 = arith.constant 0 : index
    %360 = vector.load %arg10[%c0_90, %c0_91] : memref<32x8xf32, #tpu.memory_space<vmem>>, vector<32x8xf32>
    %cst_92 = arith.constant dense<0.000000e+00> : vector<16x8xf32>
    %361 = tpu.matmul %359, %360, %cst_92 {dimension_numbers = #tpu.dot_dimension_numbers<[1], [0], [0], [1], [0, 0, 1, 1], [], []>} : vector<16x32xf32>, vector<32x8xf32>, vector<16x8xf32> -> vector<16x8xf32>
    %c0_93 = arith.constant 0 : index
    %c0_94 = arith.constant 0 : index
    %362 = vector.load %arg11[%c0_93, %c0_94] : memref<1x8xf32, #tpu.memory_space<vmem>>, vector<1x8xf32>
    %363 = vector.broadcast %362 : vector<1x8xf32> to vector<16x8xf32>
    %364 = arith.addf %361, %363 : vector<16x8xf32>
    %365 = math.tanh %364 : vector<16x8xf32>
    %366 = arith.subf %1, %365 : vector<16x8xf32>
    %367 = arith.mulf %366, %366 : vector<16x8xf32>
    %368 = vector.shape_cast %367 : vector<16x8xf32> to vector<1x16x8xf32>
    %cst_95 = arith.constant dense<0.000000e+00> : vector<1xf32>
    %369 = vector.multi_reduction <add>, %368, %cst_95 [1, 2] : vector<1x16x8xf32> to vector<1xf32>
    %370 = vector.shape_cast %369 : vector<1xf32> to vector<1x1x1xf32>
    %371 = vector.extract %370[0, 0, 0] : f32 from vector<1x1x1xf32>
    %cst_96 = arith.constant 5.000000e+01 : f32
    %372 = arith.mulf %371, %cst_96 : f32
    %cst_97 = arith.constant -177.106766 : f32
    %373 = arith.addf %372, %cst_97 : f32
    %cst_98 = arith.constant 1.280000e+02 : f32
    %374 = arith.divf %373, %cst_98 : f32
    %375 = vector.broadcast %374 : f32 to vector<1x1xf32>
    %c0_99 = arith.constant 0 : index
    %c0_100 = arith.constant 0 : index
    %376 = vector.load %arg12[%c0_99, %c0_100] : memref<1x1xf32, #tpu.memory_space<vmem>>, vector<1x1xf32>
    tpu.vector_store %arg12[%c0_99, %c0_100], %375 {strides = array<i32>} : memref<1x1xf32, #tpu.memory_space<vmem>>, vector<1x1xf32>,
    return
  }
  func.func @transform_0(%arg0: i32) -> (i32, i32) {
    %c0_i32 = arith.constant 0 : i32
    %c0_i32_0 = arith.constant 0 : i32
    %c0_i32_1 = arith.constant 0 : i32
    return %c0_i32, %c0_i32_0 : i32, i32
  }
  func.func @transform_1(%arg0: i32) -> (i32, i32) {
    %c0_i32 = arith.constant 0 : i32
    %c0_i32_0 = arith.constant 0 : i32
    %c0_i32_1 = arith.constant 0 : i32
    return %c0_i32, %c0_i32_0 : i32, i32
  }
  func.func @transform_2(%arg0: i32) -> (i32, i32) {
    %c0_i32 = arith.constant 0 : i32
    %c0_i32_0 = arith.constant 0 : i32
    %c0_i32_1 = arith.constant 0 : i32
    return %c0_i32, %c0_i32_0 : i32, i32
  }
  func.func @transform_3(%arg0: i32) -> (i32, i32) {
    %c0_i32 = arith.constant 0 : i32
    %c0_i32_0 = arith.constant 0 : i32
    %c0_i32_1 = arith.constant 0 : i32
    return %c0_i32, %c0_i32_0 : i32, i32
  }
  func.func @transform_4(%arg0: i32) -> (i32, i32) {
    %c0_i32 = arith.constant 0 : i32
    %c0_i32_0 = arith.constant 0 : i32
    %c0_i32_1 = arith.constant 0 : i32
    return %c0_i32, %c0_i32_0 : i32, i32
  }
  func.func @transform_5(%arg0: i32) -> (i32, i32) {
    %c0_i32 = arith.constant 0 : i32
    %c0_i32_0 = arith.constant 0 : i32
    %c0_i32_1 = arith.constant 0 : i32
    return %c0_i32, %c0_i32_0 : i32, i32
  }
  func.func @transform_6(%arg0: i32) -> (i32, i32) {
    %c0_i32 = arith.constant 0 : i32
    %c0_i32_0 = arith.constant 0 : i32
    %c0_i32_1 = arith.constant 0 : i32
    return %c0_i32, %c0_i32_0 : i32, i32
  }
  func.func @transform_7(%arg0: i32) -> (i32, i32) {
    %c0_i32 = arith.constant 0 : i32
    %c0_i32_0 = arith.constant 0 : i32
    %c0_i32_1 = arith.constant 0 : i32
    return %c0_i32, %c0_i32_0 : i32, i32
  }
  func.func @transform_8(%arg0: i32) -> (i32, i32) {
    %c0_i32 = arith.constant 0 : i32
    %c0_i32_0 = arith.constant 0 : i32
    %c0_i32_1 = arith.constant 0 : i32
    return %c0_i32, %c0_i32_0 : i32, i32
  }
  func.func @transform_9(%arg0: i32) -> (i32, i32) {
    %c0_i32 = arith.constant 0 : i32
    %c0_i32_0 = arith.constant 0 : i32
    %c0_i32_1 = arith.constant 0 : i32
    return %c0_i32, %c0_i32_0 : i32, i32
  }
  func.func @transform_10(%arg0: i32) -> (i32, i32) {
    %c0_i32 = arith.constant 0 : i32
    %c0_i32_0 = arith.constant 0 : i32
    %c0_i32_1 = arith.constant 0 : i32
    return %c0_i32, %c0_i32_0 : i32, i32
  }
  func.func @transform_11(%arg0: i32) -> (i32, i32) {
    %c0_i32 = arith.constant 0 : i32
    %c0_i32_0 = arith.constant 0 : i32
    %c0_i32_1 = arith.constant 0 : i32
    return %c0_i32, %c0_i32_0 : i32, i32
  }
}

</mosaic_0001>

<llo_original>
// kernel: tpu_custom_call.1
$region0: #{tpu_custom_call.1}
  #allocation0 [shape = 'u32[]', space=smem, size = 0x4, offset = 0x4, fixed_abs, tag = 'smem constant byte address 0x4 - core index']
  #allocation1 [shape = 'u32[144,128]{1,0:T(1,128)}', space=vmem, size = 0x12000, scoped, tag = 'internal scratch']
  #allocation2 [shape = 'f32[16,128]{1,0:T(8,128)}', space=vmem, size = 0x2000, scoped, tag = 'scratch operand']
  #allocation3 [shape = 'f32[16,32]{1,0:T(8,128)}', space=vmem, size = 0x2000, scoped, tag = 'scratch operand']
  %s0 = inlined_call_operand.hbm [shape: f32[16,16], index: 0, kind: input, shape index: {}]
  %s1 = inlined_call_operand.vmem [shape: f32[16,8], index: 1, kind: input, shape index: {}]
  %s2 = inlined_call_operand.hbm [shape: f32[16,32], index: 2, kind: input, shape index: {}]
  %s3 = inlined_call_operand.vmem [shape: f32[1,32], index: 3, kind: input, shape index: {}]
  %s4 = inlined_call_operand.vmem [shape: f32[32,32], index: 4, kind: input, shape index: {}]
  %s5 = inlined_call_operand.vmem [shape: f32[1,32], index: 5, kind: input, shape index: {}]
  %s6 = inlined_call_operand.vmem [shape: f32[32,128], index: 6, kind: input, shape index: {}]
  %s7 = inlined_call_operand.hbm [shape: f32[32,128], index: 7, kind: input, shape index: {}]
  %s8 = inlined_call_operand.vmem [shape: f32[1,128], index: 8, kind: input, shape index: {}]
  %s9 = inlined_call_operand.vmem [shape: f32[32,8], index: 9, kind: input, shape index: {}]
  %s10 = inlined_call_operand.vmem [shape: f32[1,8], index: 10, kind: input, shape index: {}]
  %s11 = inlined_call_operand.hbm [shape: f32[1,1], index: 11, kind: output, shape index: {}]
  %s12 = sld [smem:[#allocation0]]
  $region66: #{tpu_custom_call.1} parent=0
    _
  %s14 = ssub.s32 1, %s12
  %s15 = scalar_select 0, %s14, %s12
  $region1: #{tpu_custom_call.1} parent=0
    #allocation4 [shape = 'u8[8192]{0}', space=vmem, size = 0x2000, scoped, tag = 'input window, operand 0, single buffered']
    #allocation5 [shape = 's32[1]{0}', space=sflag, size = 0x4, scoped, tag = 'scoped memory for tpu_custom_call.1']
    #allocation6 [shape = 's32[1]{0}', space=sflag, size = 0x4, scoped, tag = 'scoped memory for tpu_custom_call.1']
    #allocation7 [shape = 'u8[8192]{0}', space=vmem, size = 0x2000, scoped, tag = 'input window, operand 2, single buffered']
    #allocation8 [shape = 's32[1]{0}', space=sflag, size = 0x4, scoped, tag = 'scoped memory for tpu_custom_call.1']
    #allocation9 [shape = 'u8[16384]{0}', space=vmem, size = 0x4000, scoped, tag = 'input window, operand 7, single buffered']
    #allocation10 [shape = 'u8[512]{0}', space=vmem, size = 0x400, scoped, tag = 'output window, operand 0, single buffered']
    %16 = vsyncpa [#allocation5], 0
    %17 = vsyncpa [#allocation8], 0
    %18 = vsyncpa [#allocation6], 0
    // Predicated region
    $region2: #{tpu_custom_call.1} parent=1 // pred_check
      _
    $region3: #{tpu_custom_call.1} parent=1 // pred_check_branch
      %20 = sbr.rel (0) target = $region5
    $region4: #{tpu_custom_call.1} parent=1 // pred_region
      %s22 = ssub.s32 256, 256
      %23 = vsyncadd [#allocation5], %s22
      %s24 = sshll.u32 [#allocation4], 4
      %s25 = int_to_ptr.vmem [resolvable:$true] %s24
      %30 = dma.hbm_to_vmem [thread:$0]  %s0, 256, %s25, [#allocation5], 128, 128, 8
    $region5: #{tpu_custom_call.1} parent=1 // pred_fallthru
      _
    // Predicated region
    $region6: #{tpu_custom_call.1} parent=1 // pred_check
      _
    $region7: #{tpu_custom_call.1} parent=1 // pred_check_branch
      %32 = sbr.rel (0) target = $region9
    $region8: #{tpu_custom_call.1} parent=1 // pred_region
      _
    $region9: #{tpu_custom_call.1} parent=1 // pred_fallthru
      _
    // Predicated region
    $region10: #{tpu_custom_call.1} parent=1 // pred_check
      _
    $region11: #{tpu_custom_call.1} parent=1 // pred_check_branch
      %34 = sbr.rel (0) target = $region13
    $region12: #{tpu_custom_call.1} parent=1 // pred_region
      %s36 = ssub.s32 256, 256
      %37 = vsyncadd [#allocation8], %s36
      %s38 = sshll.u32 [#allocation7], 4
      %s39 = int_to_ptr.vmem [resolvable:$true] %s38
      %44 = dma.hbm_to_vmem [thread:$0]  %s2, 256, %s39, [#allocation8], 128, 128, 8
    $region13: #{tpu_custom_call.1} parent=1 // pred_fallthru
      _
    // Predicated region
    $region14: #{tpu_custom_call.1} parent=1 // pred_check
      _
    $region15: #{tpu_custom_call.1} parent=1 // pred_check_branch
      %46 = sbr.rel (0) target = $region17
    $region16: #{tpu_custom_call.1} parent=1 // pred_region
      _
    $region17: #{tpu_custom_call.1} parent=1 // pred_fallthru
      _
    // Predicated region
    $region18: #{tpu_custom_call.1} parent=1 // pred_check
      _
    $region19: #{tpu_custom_call.1} parent=1 // pred_check_branch
      %48 = sbr.rel (0) target = $region21
    $region20: #{tpu_custom_call.1} parent=1 // pred_region
      _
    $region21: #{tpu_custom_call.1} parent=1 // pred_fallthru
      _
    // Predicated region
    $region22: #{tpu_custom_call.1} parent=1 // pred_check
      _
    $region23: #{tpu_custom_call.1} parent=1 // pred_check_branch
      %50 = sbr.rel (0) target = $region25
    $region24: #{tpu_custom_call.1} parent=1 // pred_region
      _
    $region25: #{tpu_custom_call.1} parent=1 // pred_fallthru
      _
    // Predicated region
    $region26: #{tpu_custom_call.1} parent=1 // pred_check
      _
    $region27: #{tpu_custom_call.1} parent=1 // pred_check_branch
      %52 = sbr.rel (0) target = $region29
    $region28: #{tpu_custom_call.1} parent=1 // pred_region
      _
    $region29: #{tpu_custom_call.1} parent=1 // pred_fallthru
      _
    // Predicated region
    $region30: #{tpu_custom_call.1} parent=1 // pred_check
      _
    $region31: #{tpu_custom_call.1} parent=1 // pred_check_branch
      %54 = sbr.rel (0) target = $region33
    $region32: #{tpu_custom_call.1} parent=1 // pred_region
      %s56 = ssub.s32 512, 512
      %57 = vsyncadd [#allocation8], %s56
      %s58 = sshll.u32 [#allocation9], 4
      %s59 = int_to_ptr.vmem [resolvable:$true] %s58
      %64 = dma.hbm_to_vmem [thread:$0]  %s7, 512, %s59, [#allocation8], 128, 128, 8
    $region33: #{tpu_custom_call.1} parent=1 // pred_fallthru
      _
    // Predicated region
    $region34: #{tpu_custom_call.1} parent=1 // pred_check
      _
    $region35: #{tpu_custom_call.1} parent=1 // pred_check_branch
      %66 = sbr.rel (0) target = $region37
    $region36: #{tpu_custom_call.1} parent=1 // pred_region
      _
    $region37: #{tpu_custom_call.1} parent=1 // pred_fallthru
      _
    // Predicated region
    $region38: #{tpu_custom_call.1} parent=1 // pred_check
      _
    $region39: #{tpu_custom_call.1} parent=1 // pred_check_branch
      %68 = sbr.rel (0) target = $region41
    $region40: #{tpu_custom_call.1} parent=1 // pred_region
      _
    $region41: #{tpu_custom_call.1} parent=1 // pred_fallthru
      _
    // Predicated region
    $region42: #{tpu_custom_call.1} parent=1 // pred_check
      _
    $region43: #{tpu_custom_call.1} parent=1 // pred_check_branch
      %70 = sbr.rel (0) target = $region45
    $region44: #{tpu_custom_call.1} parent=1 // pred_region
      _
    $region45: #{tpu_custom_call.1} parent=1 // pred_fallthru
      _
    // Predicated region
    $region46: #{tpu_custom_call.1} parent=1 // pred_check
      _
    $region47: #{tpu_custom_call.1} parent=1 // pred_check_branch
      %72 = sbr.rel (0) target = $region49
    $region48: #{tpu_custom_call.1} parent=1 // pred_region
      %73 = dma.done [#allocation5], 256
    $region49: #{tpu_custom_call.1} parent=1 // pred_fallthru
      _
    // Predicated region
    $region50: #{tpu_custom_call.1} parent=1 // pred_check
      _
    $region51: #{tpu_custom_call.1} parent=1 // pred_check_branch
      %75 = sbr.rel (0) target = $region53
    $region52: #{tpu_custom_call.1} parent=1 // pred_region
      %76 = dma.done [#allocation8], 256
    $region53: #{tpu_custom_call.1} parent=1 // pred_fallthru
      _
    // Predicated region
    $region54: #{tpu_custom_call.1} parent=1 // pred_check
      _
    $region55: #{tpu_custom_call.1} parent=1 // pred_check_branch
      %78 = sbr.rel (0) target = $region57
    $region56: #{tpu_custom_call.1} parent=1 // pred_region
      %79 = dma.done [#allocation8], 512
    $region57: #{tpu_custom_call.1} parent=1 // pred_fallthru
      _
    %v80 = vld [vmem:[#allocation4] sm:$0xff]
    %v81 = vld [vmem:[#allocation4 + $0x8] sm:$0xff]
    %v82 = vld [vmem:[%s1] sm:$0xff]
    %v83 = vld [vmem:[%s1 + $0x8] sm:$0xff]
    %v84 = vld [vmem:[#allocation7] sm:$0xff]
    %v85 = vld [vmem:[#allocation7 + $0x8] sm:$0xff]
    %v86 = vld [vmem:[%s3] sm:$0x1]
    %v88 = vlaneseq
    %v89 = vshrl.u32 %v88, 7
    %v90 = vsub.s32 0, %v89
    %v91 = vrot.slane %v86, %v90
    %vm93 = vcmask 130048
    %v95 = vsel %vm93, %v80, 0
    %v98 = vsel %vm93, %v81, 0
    %100 = vmatprep.subr.mxu0 0.0
    %101 = vmatpush1.msra.mxu0 %v84
    %102 = vmatprep.subr.mxu0 0.0
    %103 = vmatpush1.msra.mxu0 %v85
    %104 = vmatprep.subr.mxu0 0.0
    %105 = vmatpush1.msra.mxu0 0.0
    %106 = vmatprep.subr.mxu0 0.0
    %107 = vmatpush1.msra.mxu0 0.0
    %108 = vmatprep.subr.mxu0 0.0
    %109 = vmatpush1.msra.mxu0 0.0
    %110 = vmatprep.subr.mxu0 0.0
    %111 = vmatpush1.msra.mxu0 0.0
    %112 = vmatprep.subr.mxu0 0.0
    %113 = vmatpush1.msra.mxu0 0.0
    %114 = vmatprep.subr.mxu0 0.0
    %115 = vmatpush1.msra.mxu0 0.0
    %116 = vmatprep.subr.mxu0 0.0
    %117 = vmatpush1.msra.mxu0 0.0
    %118 = vmatprep.subr.mxu0 0.0
    %119 = vmatpush1.msra.mxu0 0.0
    %120 = vmatprep.subr.mxu0 0.0
    %121 = vmatpush1.msra.mxu0 0.0
    %122 = vmatprep.subr.mxu0 0.0
    %123 = vmatpush1.msra.mxu0 0.0
    %124 = vmatprep.subr.mxu0 0.0
    %125 = vmatpush1.msra.mxu0 0.0
    %126 = vmatprep.subr.mxu0 0.0
    %127 = vmatpush1.msra.mxu0 0.0
    %128 = vmatprep.subr.mxu0 0.0
    %129 = vmatpush1.msra.mxu0 0.0
    %130 = vmatprep.subr.mxu0 0.0
    %131 = vmatpush1.msra.mxu0 0.0
    %132 = vmatprep.subr.mxu0 0.0
    %133 = vmatpush1.msra.mxu0 0.0
    %134 = vmatprep.subr.mxu0 0.0
    %135 = vmatpush1.msra.mxu0 0.0
    %136 = vmatprep.subr.mxu0 0.0
    %137 = vmatpush1.msra.mxu0 0.0
    %138 = vmatprep.subr.mxu0 0.0
    %139 = vmatpush1.msra.mxu0 0.0
    %140 = vmatprep.subr.mxu0 0.0
    %141 = vmatpush1.msra.mxu0 0.0
    %142 = vmatprep.subr.mxu0 0.0
    %143 = vmatpush1.msra.mxu0 0.0
    %144 = vmatprep.subr.mxu0 0.0
    %145 = vmatpush1.msra.mxu0 0.0
    %146 = vmatprep.subr.mxu0 0.0
    %147 = vmatpush1.msra.mxu0 0.0
    %148 = vmatprep.subr.mxu0 0.0
    %149 = vmatpush1.msra.mxu0 0.0
    %150 = vmatprep.subr.mxu0 0.0
    %151 = vmatpush1.msra.mxu0 0.0
    %152 = vmatprep.subr.mxu0 0.0
    %153 = vmatpush1.msra.mxu0 0.0
    %154 = vmatprep.subr.mxu0 0.0
    %155 = vmatpush1.msra.mxu0 0.0
    %156 = vmatprep.subr.mxu0 0.0
    %157 = vmatpush1.msra.mxu0 0.0
    %158 = vmatprep.subr.mxu0 0.0
    %159 = vmatpush1.msra.mxu0 0.0
    %160 = vmatprep.subr.mxu0 0.0
    %161 = vmatpush1.msra.mxu0 0.0
    %162 = vmatprep.subr.mxu0 0.0
    %163 = vmatpush1.msra.mxu0 0.0
    %164 = vmatprep.mubr.f32.mxu0 0.0
    %165 = vmatmul.mubr.f32.gmra.mrb[0].mxu0 %v95
    %v166 = vpop.f32.mrb[0].mxu0
    %v167 = vadd.f32 %v91, %v166
    %v168 = vpop.f32.mrb[0].mxu0
    %169 = vmatprep.mubr.f32.mxu0 0.0
    %170 = vmatmul.mubr.f32.gmra.mrb[0].mxu0 %v98
    %v171 = vpop.f32.mrb[0].mxu0
    %v172 = vadd.f32 %v91, %v171
    %v173 = vpop.f32.mrb[0].mxu0
    %174 = vdwg.mxu0
    %v175 = vmax.f32 %v167, 0.0
    %v176 = vmax.f32 %v172, 0.0
    %v177 = vld [vmem:[%s4] sm:$0xff]
    %v178 = vld [vmem:[%s4 + $0x8] sm:$0xff]
    %v179 = vld [vmem:[%s4 + $0x10] sm:$0xff]
    %v180 = vld [vmem:[%s4 + $0x18] sm:$0xff]
    %v181 = vld [vmem:[%s5] sm:$0x1]
    %v183 = vlaneseq
    %v184 = vshrl.u32 %v183, 7
    %v185 = vsub.s32 0, %v184
    %v186 = vrot.slane %v181, %v185
    %vm188 = vcmask 261120
    %v190 = vsel %vm188, %v175, 0
    %v193 = vsel %vm188, %v176, 0
    %195 = vmatprep.subr.mxu0 0.0
    %196 = vmatpush1.msra.mxu0 %v177
    %197 = vmatprep.subr.mxu0 0.0
    %198 = vmatpush1.msra.mxu0 %v178
    %199 = vmatprep.subr.mxu0 0.0
    %200 = vmatpush1.msra.mxu0 %v179
    %201 = vmatprep.subr.mxu0 0.0
    %202 = vmatpush1.msra.mxu0 %v180
    %203 = vmatprep.subr.mxu0 0.0
    %204 = vmatpush1.msra.mxu0 0.0
    %205 = vmatprep.subr.mxu0 0.0
    %206 = vmatpush1.msra.mxu0 0.0
    %207 = vmatprep.subr.mxu0 0.0
    %208 = vmatpush1.msra.mxu0 0.0
    %209 = vmatprep.subr.mxu0 0.0
    %210 = vmatpush1.msra.mxu0 0.0
    %211 = vmatprep.subr.mxu0 0.0
    %212 = vmatpush1.msra.mxu0 0.0
    %213 = vmatprep.subr.mxu0 0.0
    %214 = vmatpush1.msra.mxu0 0.0
    %215 = vmatprep.subr.mxu0 0.0
    %216 = vmatpush1.msra.mxu0 0.0
    %217 = vmatprep.subr.mxu0 0.0
    %218 = vmatpush1.msra.mxu0 0.0
    %219 = vmatprep.subr.mxu0 0.0
    %220 = vmatpush1.msra.mxu0 0.0
    %221 = vmatprep.subr.mxu0 0.0
    %222 = vmatpush1.msra.mxu0 0.0
    %223 = vmatprep.subr.mxu0 0.0
    %224 = vmatpush1.msra.mxu0 0.0
    %225 = vmatprep.subr.mxu0 0.0
    %226 = vmatpush1.msra.mxu0 0.0
    %227 = vmatprep.subr.mxu0 0.0
    %228 = vmatpush1.msra.mxu0 0.0
    %229 = vmatprep.subr.mxu0 0.0
    %230 = vmatpush1.msra.mxu0 0.0
    %231 = vmatprep.subr.mxu0 0.0
    %232 = vmatpush1.msra.mxu0 0.0
    %233 = vmatprep.subr.mxu0 0.0
    %234 = vmatpush1.msra.mxu0 0.0
    %235 = vmatprep.subr.mxu0 0.0
    %236 = vmatpush1.msra.mxu0 0.0
    %237 = vmatprep.subr.mxu0 0.0
    %238 = vmatpush1.msra.mxu0 0.0
    %239 = vmatprep.subr.mxu0 0.0
    %240 = vmatpush1.msra.mxu0 0.0
    %241 = vmatprep.subr.mxu0 0.0
    %242 = vmatpush1.msra.mxu0 0.0
    %243 = vmatprep.subr.mxu0 0.0
    %244 = vmatpush1.msra.mxu0 0.0
    %245 = vmatprep.subr.mxu0 0.0
    %246 = vmatpush1.msra.mxu0 0.0
    %247 = vmatprep.subr.mxu0 0.0
    %248 = vmatpush1.msra.mxu0 0.0
    %249 = vmatprep.subr.mxu0 0.0
    %250 = vmatpush1.msra.mxu0 0.0
    %251 = vmatprep.subr.mxu0 0.0
    %252 = vmatpush1.msra.mxu0 0.0
    %253 = vmatprep.subr.mxu0 0.0
    %254 = vmatpush1.msra.mxu0 0.0
    %255 = vmatprep.subr.mxu0 0.0
    %256 = vmatpush1.msra.mxu0 0.0
    %257 = vmatprep.subr.mxu0 0.0
    %258 = vmatpush1.msra.mxu0 0.0
    %259 = vmatprep.mubr.f32.mxu0 0.0
    %260 = vmatmul.mubr.f32.gmra.mrb[0].mxu0 %v190
    %v261 = vpop.f32.mrb[0].mxu0
    %v262 = vadd.f32 %v186, %v261
    %v263 = vpop.f32.mrb[0].mxu0
    %264 = vmatprep.mubr.f32.mxu0 0.0
    %265 = vmatmul.mubr.f32.gmra.mrb[0].mxu0 %v193
    %v266 = vpop.f32.mrb[0].mxu0
    %v267 = vadd.f32 %v186, %v266
    %v268 = vpop.f32.mrb[0].mxu0
    %269 = vdwg.mxu0
    %v270 = vld [vmem:[%s6] sm:$0xff]
    %v271 = vld [vmem:[%s6 + $0x8] sm:$0xff]
    %v272 = vld [vmem:[%s6 + $0x10] sm:$0xff]
    %v273 = vld [vmem:[%s6 + $0x18] sm:$0xff]
    %v274 = vld [vmem:[%s8] sm:$0x1]
    %v276 = vlaneseq
    %v277 = vshrl.u32 %v276, 7
    %v278 = vsub.s32 0, %v277
    %v279 = vrot.slane %v274, %v278
    %v282 = vsel %vm188, %v262, 0
    %v285 = vsel %vm188, %v267, 0
    %287 = vmatprep.subr.mxu0 0.0
    %288 = vmatpush1.msra.mxu0 %v270
    %289 = vmatprep.subr.mxu0 0.0
    %290 = vmatpush1.msra.mxu0 %v271
    %291 = vmatprep.subr.mxu0 0.0
    %292 = vmatpush1.msra.mxu0 %v272
    %293 = vmatprep.subr.mxu0 0.0
    %294 = vmatpush1.msra.mxu0 %v273
    %295 = vmatprep.subr.mxu0 0.0
    %296 = vmatpush1.msra.mxu0 0.0
    %297 = vmatprep.subr.mxu0 0.0
    %298 = vmatpush1.msra.mxu0 0.0
    %299 = vmatprep.subr.mxu0 0.0
    %300 = vmatpush1.msra.mxu0 0.0
    %301 = vmatprep.subr.mxu0 0.0
    %302 = vmatpush1.msra.mxu0 0.0
    %303 = vmatprep.subr.mxu0 0.0
    %304 = vmatpush1.msra.mxu0 0.0
    %305 = vmatprep.subr.mxu0 0.0
    %306 = vmatpush1.msra.mxu0 0.0
    %307 = vmatprep.subr.mxu0 0.0
    %308 = vmatpush1.msra.mxu0 0.0
    %309 = vmatprep.subr.mxu0 0.0
    %310 = vmatpush1.msra.mxu0 0.0
    %311 = vmatprep.subr.mxu0 0.0
    %312 = vmatpush1.msra.mxu0 0.0
    %313 = vmatprep.subr.mxu0 0.0
    %314 = vmatpush1.msra.mxu0 0.0
    %315 = vmatprep.subr.mxu0 0.0
    %316 = vmatpush1.msra.mxu0 0.0
    %317 = vmatprep.subr.mxu0 0.0
    %318 = vmatpush1.msra.mxu0 0.0
    %319 = vmatprep.subr.mxu0 0.0
    %320 = vmatpush1.msra.mxu0 0.0
    %321 = vmatprep.subr.mxu0 0.0
    %322 = vmatpush1.msra.mxu0 0.0
    %323 = vmatprep.subr.mxu0 0.0
    %324 = vmatpush1.msra.mxu0 0.0
    %325 = vmatprep.subr.mxu0 0.0
    %326 = vmatpush1.msra.mxu0 0.0
    %327 = vmatprep.subr.mxu0 0.0
    %328 = vmatpush1.msra.mxu0 0.0
    %329 = vmatprep.subr.mxu0 0.0
    %330 = vmatpush1.msra.mxu0 0.0
    %331 = vmatprep.subr.mxu0 0.0
    %332 = vmatpush1.msra.mxu0 0.0
    %333 = vmatprep.subr.mxu0 0.0
    %334 = vmatpush1.msra.mxu0 0.0
    %335 = vmatprep.subr.mxu0 0.0
    %336 = vmatpush1.msra.mxu0 0.0
    %337 = vmatprep.subr.mxu0 0.0
    %338 = vmatpush1.msra.mxu0 0.0
    %339 = vmatprep.subr.mxu0 0.0
    %340 = vmatpush1.msra.mxu0 0.0
    %341 = vmatprep.subr.mxu0 0.0
    %342 = vmatpush1.msra.mxu0 0.0
    %343 = vmatprep.subr.mxu0 0.0
    %344 = vmatpush1.msra.mxu0 0.0
    %345 = vmatprep.subr.mxu0 0.0
    %346 = vmatpush1.msra.mxu0 0.0
    %347 = vmatprep.subr.mxu0 0.0
    %348 = vmatpush1.msra.mxu0 0.0
    %349 = vmatprep.subr.mxu0 0.0
    %350 = vmatpush1.msra.mxu0 0.0
    %351 = vmatprep.mubr.f32.mxu0 0.0
    %352 = vmatmul.mubr.f32.gmra.mrb[0].mxu0 %v282
    %v353 = vpop.f32.mrb[0].mxu0
    %v354 = vadd.f32 %v279, %v353
    %v355 = vpop.f32.mrb[0].mxu0
    %356 = vmatprep.mubr.f32.mxu0 0.0
    %357 = vmatmul.mubr.f32.gmra.mrb[0].mxu0 %v285
    %v358 = vpop.f32.mrb[0].mxu0
    %v359 = vadd.f32 %v279, %v358
    %v360 = vpop.f32.mrb[0].mxu0
    %361 = vdwg.mxu0
    %362 = vst [vmem:[#allocation2] sm:$0xff] %v354
    %363 = vst [vmem:[#allocation2 + $0x8] sm:$0xff] %v359
    %v364 = vld [vmem:[#allocation9] sm:$0xff]
    %v365 = vld [vmem:[#allocation9 + $0x8] sm:$0xff]
    %v366 = vld [vmem:[#allocation9 + $0x10] sm:$0xff]
    %v367 = vld [vmem:[#allocation9 + $0x18] sm:$0xff]
    %v368 = vld [vmem:[#allocation2] sm:$0x1]
    %v370 = vsel %vm188, 0.0, 0
    %372 = vmatprep.subr.mxu0 0.0
    %373 = vmatpush1.msra.mxu0 %v364
    %374 = vmatprep.subr.mxu0 0.0
    %375 = vmatpush1.msra.mxu0 %v365
    %376 = vmatprep.subr.mxu0 0.0
    %377 = vmatpush1.msra.mxu0 %v366
    %378 = vmatprep.subr.mxu0 0.0
    %379 = vmatpush1.msra.mxu0 %v367
    %380 = vmatprep.subr.mxu0 0.0
    %381 = vmatpush1.msra.mxu0 0.0
    %382 = vmatprep.subr.mxu0 0.0
    %383 = vmatpush1.msra.mxu0 0.0
    %384 = vmatprep.subr.mxu0 0.0
    %385 = vmatpush1.msra.mxu0 0.0
    %386 = vmatprep.subr.mxu0 0.0
    %387 = vmatpush1.msra.mxu0 0.0
    %388 = vmatprep.subr.mxu0 0.0
    %389 = vmatpush1.msra.mxu0 0.0
    %390 = vmatprep.subr.mxu0 0.0
    %391 = vmatpush1.msra.mxu0 0.0
    %392 = vmatprep.subr.mxu0 0.0
    %393 = vmatpush1.msra.mxu0 0.0
    %394 = vmatprep.subr.mxu0 0.0
    %395 = vmatpush1.msra.mxu0 0.0
    %396 = vmatprep.subr.mxu0 0.0
    %397 = vmatpush1.msra.mxu0 0.0
    %398 = vmatprep.subr.mxu0 0.0
    %399 = vmatpush1.msra.mxu0 0.0
    %400 = vmatprep.subr.mxu0 0.0
    %401 = vmatpush1.msra.mxu0 0.0
    %402 = vmatprep.subr.mxu0 0.0
    %403 = vmatpush1.msra.mxu0 0.0
    %404 = vmatprep.subr.mxu0 0.0
    %405 = vmatpush1.msra.mxu0 0.0
    %406 = vmatprep.subr.mxu0 0.0
    %407 = vmatpush1.msra.mxu0 0.0
    %408 = vmatprep.subr.mxu0 0.0
    %409 = vmatpush1.msra.mxu0 0.0
    %410 = vmatprep.subr.mxu0 0.0
    %411 = vmatpush1.msra.mxu0 0.0
    %412 = vmatprep.subr.mxu0 0.0
    %413 = vmatpush1.msra.mxu0 0.0
    %414 = vmatprep.subr.mxu0 0.0
    %415 = vmatpush1.msra.mxu0 0.0
    %416 = vmatprep.subr.mxu0 0.0
    %417 = vmatpush1.msra.mxu0 0.0
    %418 = vmatprep.subr.mxu0 0.0
    %419 = vmatpush1.msra.mxu0 0.0
    %420 = vmatprep.subr.mxu0 0.0
    %421 = vmatpush1.msra.mxu0 0.0
    %422 = vmatprep.subr.mxu0 0.0
    %423 = vmatpush1.msra.mxu0 0.0
    %424 = vmatprep.subr.mxu0 0.0
    %425 = vmatpush1.msra.mxu0 0.0
    %426 = vmatprep.subr.mxu0 0.0
    %427 = vmatpush1.msra.mxu0 0.0
    %428 = vmatprep.subr.mxu0 0.0
    %429 = vmatpush1.msra.mxu0 0.0
    %430 = vmatprep.subr.mxu0 0.0
    %431 = vmatpush1.msra.mxu0 0.0
    %432 = vmatprep.subr.mxu0 0.0
    %433 = vmatpush1.msra.mxu0 0.0
    %434 = vmatprep.subr.mxu0 0.0
    %435 = vmatpush1.msra.mxu0 0.0
    %436 = vmatprep.mubr.f32.mxu0 0.0
    %437 = vmatmul.mubr.f32.gmra.mrb[0].mxu0 %v370
    %v438 = vpop.f32.mrb[0].mxu0
    %v439 = vadd.f32 0.0, %v438
    %v440 = vpop.f32.mrb[0].mxu0
    %441 = vdwg.mxu0
    %v442 = vadd.f32 %v368, %v439
    %v443 = vxor.u32 %v442, 2147483648
    %v444 = vmul.f32 %v443, 1.442695
    %v445 = vpow.pop %v444
    %v446 = vadd.f32 %v445, 1.0
    %v447 = vrcp.pop %v446
    %v448 = vmul.f32 1.0, %v447
    %v449 = vtanh.pop %v442
    %v450 = vmul.f32 %v448, 0.0
    %452 = vrot.lane.b32.xlu0 %v449, 64
    %v453 = vpop.permute.xlu0 %452
    %v455 = vmul.f32 %v448, %v453
    %457 = vrot.lane.b32.xlu0 %v455, 32
    %v458 = vpop.permute.xlu0 %457
    %v460 = vadd.f32 %v450, %v458
    %v461 = vtanh.pop %v460
    %463 = vrot.lane.b32.xlu0 %v461, 64
    %v464 = vpop.permute.xlu0 %463
    %v466 = vmul.f32 %v448, %v464
    %468 = vrot.lane.b32.xlu0 %v466, 32
    %v469 = vpop.permute.xlu0 %468
    %vm471 = vcmask 253952
    %472 = vst.msk [vmem:[#allocation3] sm:$0x1] %vm471, %v469
    %v473 = vld [vmem:[#allocation2 + $0x1] sm:$0x1]
    %v474 = vsel %vm188, %v469, 0
    %476 = vmatprep.subr.mxu0 0.0
    %477 = vmatpush1.msra.mxu0 %v364
    %478 = vmatprep.subr.mxu0 0.0
    %479 = vmatpush1.msra.mxu0 %v365
    %480 = vmatprep.subr.mxu0 0.0
    %481 = vmatpush1.msra.mxu0 %v366
    %482 = vmatprep.subr.mxu0 0.0
    %483 = vmatpush1.msra.mxu0 %v367
    %484 = vmatprep.subr.mxu0 0.0
    %485 = vmatpush1.msra.mxu0 0.0
    %486 = vmatprep.subr.mxu0 0.0
    %487 = vmatpush1.msra.mxu0 0.0
    %488 = vmatprep.subr.mxu0 0.0
    %489 = vmatpush1.msra.mxu0 0.0
    %490 = vmatprep.subr.mxu0 0.0
    %491 = vmatpush1.msra.mxu0 0.0
    %492 = vmatprep.subr.mxu0 0.0
    %493 = vmatpush1.msra.mxu0 0.0
    %494 = vmatprep.subr.mxu0 0.0
    %495 = vmatpush1.msra.mxu0 0.0
    %496 = vmatprep.subr.mxu0 0.0
    %497 = vmatpush1.msra.mxu0 0.0
    %498 = vmatprep.subr.mxu0 0.0
    %499 = vmatpush1.msra.mxu0 0.0
    %500 = vmatprep.subr.mxu0 0.0
    %501 = vmatpush1.msra.mxu0 0.0
    %502 = vmatprep.subr.mxu0 0.0
    %503 = vmatpush1.msra.mxu0 0.0
    %504 = vmatprep.subr.mxu0 0.0
    %505 = vmatpush1.msra.mxu0 0.0
    %506 = vmatprep.subr.mxu0 0.0
    %507 = vmatpush1.msra.mxu0 0.0
    %508 = vmatprep.subr.mxu0 0.0
    %509 = vmatpush1.msra.mxu0 0.0
    %510 = vmatprep.subr.mxu0 0.0
    %511 = vmatpush1.msra.mxu0 0.0
    %512 = vmatprep.subr.mxu0 0.0
    %513 = vmatpush1.msra.mxu0 0.0
    %514 = vmatprep.subr.mxu0 0.0
    %515 = vmatpush1.msra.mxu0 0.0
    %516 = vmatprep.subr.mxu0 0.0
    %517 = vmatpush1.msra.mxu0 0.0
    %518 = vmatprep.subr.mxu0 0.0
    %519 = vmatpush1.msra.mxu0 0.0
    %520 = vmatprep.subr.mxu0 0.0
    %521 = vmatpush1.msra.mxu0 0.0
    %522 = vmatprep.subr.mxu0 0.0
    %523 = vmatpush1.msra.mxu0 0.0
    %524 = vmatprep.subr.mxu0 0.0
    %525 = vmatpush1.msra.mxu0 0.0
    %526 = vmatprep.subr.mxu0 0.0
    %527 = vmatpush1.msra.mxu0 0.0
    %528 = vmatprep.subr.mxu0 0.0
    %529 = vmatpush1.msra.mxu0 0.0
    %530 = vmatprep.subr.mxu0 0.0
    %531 = vmatpush1.msra.mxu0 0.0
    %532 = vmatprep.subr.mxu0 0.0
    %533 = vmatpush1.msra.mxu0 0.0
    %534 = vmatprep.subr.mxu0 0.0
    %535 = vmatpush1.msra.mxu0 0.0
    %536 = vmatprep.subr.mxu0 0.0
    %537 = vmatpush1.msra.mxu0 0.0
    %538 = vmatprep.subr.mxu0 0.0
    %539 = vmatpush1.msra.mxu0 0.0
    %540 = vmatprep.mubr.f32.mxu0 0.0
    %541 = vmatmul.mubr.f32.gmra.mrb[0].mxu0 %v474
    %v542 = vpop.f32.mrb[0].mxu0
    %v543 = vadd.f32 0.0, %v542
    %v544 = vpop.f32.mrb[0].mxu0
    %545 = vdwg.mxu0
    %v546 = vadd.f32 %v473, %v543
    %v547 = vxor.u32 %v546, 2147483648
    %v548 = vmul.f32 %v547, 1.442695
    %v549 = vpow.pop %v548
    %v550 = vadd.f32 %v549, 1.0
    %v551 = vrcp.pop %v550
    %v552 = vmul.f32 1.0, %v551
    %v553 = vtanh.pop %v546
    %v554 = vmul.f32 %v552, %v460
    %556 = vrot.lane.b32.xlu0 %v553, 64
    %v557 = vpop.permute.xlu0 %556
    %v559 = vmul.f32 %v552, %v557
    %561 = vrot.lane.b32.xlu0 %v559, 32
    %v562 = vpop.permute.xlu0 %561
    %v564 = vadd.f32 %v554, %v562
    %v565 = vtanh.pop %v564
    %567 = vrot.lane.b32.xlu0 %v565, 64
    %v568 = vpop.permute.xlu0 %567
    %v570 = vmul.f32 %v552, %v568
    %572 = vrot.lane.b32.xlu0 %v570, 32
    %v573 = vpop.permute.xlu0 %572
    %575 = vst.msk [vmem:[#allocation3 + $0x1] sm:$0x1] %vm471, %v573
    %v576 = vld [vmem:[#allocation2 + $0x2] sm:$0x1]
    %v577 = vsel %vm188, %v573, 0
    %579 = vmatprep.subr.mxu0 0.0
    %580 = vmatpush1.msra.mxu0 %v364
    %581 = vmatprep.subr.mxu0 0.0
    %582 = vmatpush1.msra.mxu0 %v365
    %583 = vmatprep.subr.mxu0 0.0
    %584 = vmatpush1.msra.mxu0 %v366
    %585 = vmatprep.subr.mxu0 0.0
    %586 = vmatpush1.msra.mxu0 %v367
    %587 = vmatprep.subr.mxu0 0.0
    %588 = vmatpush1.msra.mxu0 0.0
    %589 = vmatprep.subr.mxu0 0.0
    %590 = vmatpush1.msra.mxu0 0.0
    %591 = vmatprep.subr.mxu0 0.0
    %592 = vmatpush1.msra.mxu0 0.0
    %593 = vmatprep.subr.mxu0 0.0
    %594 = vmatpush1.msra.mxu0 0.0
    %595 = vmatprep.subr.mxu0 0.0
    %596 = vmatpush1.msra.mxu0 0.0
    %597 = vmatprep.subr.mxu0 0.0
    %598 = vmatpush1.msra.mxu0 0.0
    %599 = vmatprep.subr.mxu0 0.0
    %600 = vmatpush1.msra.mxu0 0.0
    %601 = vmatprep.subr.mxu0 0.0
    %602 = vmatpush1.msra.mxu0 0.0
    %603 = vmatprep.subr.mxu0 0.0
    %604 = vmatpush1.msra.mxu0 0.0
    %605 = vmatprep.subr.mxu0 0.0
    %606 = vmatpush1.msra.mxu0 0.0
    %607 = vmatprep.subr.mxu0 0.0
    %608 = vmatpush1.msra.mxu0 0.0
    %609 = vmatprep.subr.mxu0 0.0
    %610 = vmatpush1.msra.mxu0 0.0
    %611 = vmatprep.subr.mxu0 0.0
    %612 = vmatpush1.msra.mxu0 0.0
    %613 = vmatprep.subr.mxu0 0.0
    %614 = vmatpush1.msra.mxu0 0.0
    %615 = vmatprep.subr.mxu0 0.0
    %616 = vmatpush1.msra.mxu0 0.0
    %617 = vmatprep.subr.mxu0 0.0
    %618 = vmatpush1.msra.mxu0 0.0
    %619 = vmatprep.subr.mxu0 0.0
    %620 = vmatpush1.msra.mxu0 0.0
    %621 = vmatprep.subr.mxu0 0.0
    %622 = vmatpush1.msra.mxu0 0.0
    %623 = vmatprep.subr.mxu0 0.0
    %624 = vmatpush1.msra.mxu0 0.0
    %625 = vmatprep.subr.mxu0 0.0
    %626 = vmatpush1.msra.mxu0 0.0
    %627 = vmatprep.subr.mxu0 0.0
    %628 = vmatpush1.msra.mxu0 0.0
    %629 = vmatprep.subr.mxu0 0.0
    %630 = vmatpush1.msra.mxu0 0.0
    %631 = vmatprep.subr.mxu0 0.0
    %632 = vmatpush1.msra.mxu0 0.0
    %633 = vmatprep.subr.mxu0 0.0
    %634 = vmatpush1.msra.mxu0 0.0
    %635 = vmatprep.subr.mxu0 0.0
    %636 = vmatpush1.msra.mxu0 0.0
    %637 = vmatprep.subr.mxu0 0.0
    %638 = vmatpush1.msra.mxu0 0.0
    %639 = vmatprep.subr.mxu0 0.0
    %640 = vmatpush1.msra.mxu0 0.0
    %641 = vmatprep.subr.mxu0 0.0
    %642 = vmatpush1.msra.mxu0 0.0
    %643 = vmatprep.mubr.f32.mxu0 0.0
    %644 = vmatmul.mubr.f32.gmra.mrb[0].mxu0 %v577
    %v645 = vpop.f32.mrb[0].mxu0
    %v646 = vadd.f32 0.0, %v645
    %v647 = vpop.f32.mrb[0].mxu0
    %648 = vdwg.mxu0
    %v649 = vadd.f32 %v576, %v646
    %v650 = vxor.u32 %v649, 2147483648
    %v651 = vmul.f32 %v650, 1.442695
    %v652 = vpow.pop %v651
    %v653 = vadd.f32 %v652, 1.0
    %v654 = vrcp.pop %v653
    %v655 = vmul.f32 1.0, %v654
    %v656 = vtanh.pop %v649
    %v657 = vmul.f32 %v655, %v564
    %659 = vrot.lane.b32.xlu0 %v656, 64
    %v660 = vpop.permute.xlu0 %659
    %v662 = vmul.f32 %v655, %v660
    %664 = vrot.lane.b32.xlu0 %v662, 32
    %v665 = vpop.permute.xlu0 %664
    %v667 = vadd.f32 %v657, %v665
    %v668 = vtanh.pop %v667
    %670 = vrot.lane.b32.xlu0 %v668, 64
    %v671 = vpop.permute.xlu0 %670
    %v673 = vmul.f32 %v655, %v671
    %675 = vrot.lane.b32.xlu0 %v673, 32
    %v676 = vpop.permute.xlu0 %675
    %678 = vst.msk [vmem:[#allocation3 + $0x2] sm:$0x1] %vm471, %v676
    %v679 = vld [vmem:[#allocation2 + $0x3] sm:$0x1]
    %v680 = vsel %vm188, %v676, 0
    %682 = vmatprep.subr.mxu0 0.0
    %683 = vmatpush1.msra.mxu0 %v364
    %684 = vmatprep.subr.mxu0 0.0
    %685 = vmatpush1.msra.mxu0 %v365
    %686 = vmatprep.subr.mxu0 0.0
    %687 = vmatpush1.msra.mxu0 %v366
    %688 = vmatprep.subr.mxu0 0.0
    %689 = vmatpush1.msra.mxu0 %v367
    %690 = vmatprep.subr.mxu0 0.0
    %691 = vmatpush1.msra.mxu0 0.0
    %692 = vmatprep.subr.mxu0 0.0
    %693 = vmatpush1.msra.mxu0 0.0
    %694 = vmatprep.subr.mxu0 0.0
    %695 = vmatpush1.msra.mxu0 0.0
    %696 = vmatprep.subr.mxu0 0.0
    %697 = vmatpush1.msra.mxu0 0.0
    %698 = vmatprep.subr.mxu0 0.0
    %699 = vmatpush1.msra.mxu0 0.0
    %700 = vmatprep.subr.mxu0 0.0
    %701 = vmatpush1.msra.mxu0 0.0
    %702 = vmatprep.subr.mxu0 0.0
    %703 = vmatpush1.msra.mxu0 0.0
    %704 = vmatprep.subr.mxu0 0.0
    %705 = vmatpush1.msra.mxu0 0.0
    %706 = vmatprep.subr.mxu0 0.0
    %707 = vmatpush1.msra.mxu0 0.0
    %708 = vmatprep.subr.mxu0 0.0
    %709 = vmatpush1.msra.mxu0 0.0
    %710 = vmatprep.subr.mxu0 0.0
    %711 = vmatpush1.msra.mxu0 0.0
    %712 = vmatprep.subr.mxu0 0.0
    %713 = vmatpush1.msra.mxu0 0.0
    %714 = vmatprep.subr.mxu0 0.0
    %715 = vmatpush1.msra.mxu0 0.0
    %716 = vmatprep.subr.mxu0 0.0
    %717 = vmatpush1.msra.mxu0 0.0
    %718 = vmatprep.subr.mxu0 0.0
    %719 = vmatpush1.msra.mxu0 0.0
    %720 = vmatprep.subr.mxu0 0.0
    %721 = vmatpush1.msra.mxu0 0.0
    %722 = vmatprep.subr.mxu0 0.0
    %723 = vmatpush1.msra.mxu0 0.0
    %724 = vmatprep.subr.mxu0 0.0
    %725 = vmatpush1.msra.mxu0 0.0
    %726 = vmatprep.subr.mxu0 0.0
    %727 = vmatpush1.msra.mxu0 0.0
    %728 = vmatprep.subr.mxu0 0.0
    %729 = vmatpush1.msra.mxu0 0.0
    %730 = vmatprep.subr.mxu0 0.0
    %731 = vmatpush1.msra.mxu0 0.0
    %732 = vmatprep.subr.mxu0 0.0
    %733 = vmatpush1.msra.mxu0 0.0
    %734 = vmatprep.subr.mxu0 0.0
    %735 = vmatpush1.msra.mxu0 0.0
    %736 = vmatprep.subr.mxu0 0.0
    %737 = vmatpush1.msra.mxu0 0.0
    %738 = vmatprep.subr.mxu0 0.0
    %739 = vmatpush1.msra.mxu0 0.0
    %740 = vmatprep.subr.mxu0 0.0
    %741 = vmatpush1.msra.mxu0 0.0
    %742 = vmatprep.subr.mxu0 0.0
    %743 = vmatpush1.msra.mxu0 0.0
    %744 = vmatprep.subr.mxu0 0.0
    %745 = vmatpush1.msra.mxu0 0.0
    %746 = vmatprep.mubr.f32.mxu0 0.0
    %747 = vmatmul.mubr.f32.gmra.mrb[0].mxu0 %v680
    %v748 = vpop.f32.mrb[0].mxu0
    %v749 = vadd.f32 0.0, %v748
    %v750 = vpop.f32.mrb[0].mxu0
    %751 = vdwg.mxu0
    %v752 = vadd.f32 %v679, %v749
    %v753 = vxor.u32 %v752, 2147483648
    %v754 = vmul.f32 %v753, 1.442695
    %v755 = vpow.pop %v754
    %v756 = vadd.f32 %v755, 1.0
    %v757 = vrcp.pop %v756
    %v758 = vmul.f32 1.0, %v757
    %v759 = vtanh.pop %v752
    %v760 = vmul.f32 %v758, %v667
    %762 = vrot.lane.b32.xlu0 %v759, 64
    %v763 = vpop.permute.xlu0 %762
    %v765 = vmul.f32 %v758, %v763
    %767 = vrot.lane.b32.xlu0 %v765, 32
    %v768 = vpop.permute.xlu0 %767
    %v770 = vadd.f32 %v760, %v768
    %v771 = vtanh.pop %v770
    %773 = vrot.lane.b32.xlu0 %v771, 64
    %v774 = vpop.permute.xlu0 %773
    %v776 = vmul.f32 %v758, %v774
    %778 = vrot.lane.b32.xlu0 %v776, 32
    %v779 = vpop.permute.xlu0 %778
    %781 = vst.msk [vmem:[#allocation3 + $0x3] sm:$0x1] %vm471, %v779
    %v782 = vld [vmem:[#allocation2 + $0x4] sm:$0x1]
    %v783 = vsel %vm188, %v779, 0
    %785 = vmatprep.subr.mxu0 0.0
    %786 = vmatpush1.msra.mxu0 %v364
    %787 = vmatprep.subr.mxu0 0.0
    %788 = vmatpush1.msra.mxu0 %v365
    %789 = vmatprep.subr.mxu0 0.0
    %790 = vmatpush1.msra.mxu0 %v366
    %791 = vmatprep.subr.mxu0 0.0
    %792 = vmatpush1.msra.mxu0 %v367
    %793 = vmatprep.subr.mxu0 0.0
    %794 = vmatpush1.msra.mxu0 0.0
    %795 = vmatprep.subr.mxu0 0.0
    %796 = vmatpush1.msra.mxu0 0.0
    %797 = vmatprep.subr.mxu0 0.0
    %798 = vmatpush1.msra.mxu0 0.0
    %799 = vmatprep.subr.mxu0 0.0
    %800 = vmatpush1.msra.mxu0 0.0
    %801 = vmatprep.subr.mxu0 0.0
    %802 = vmatpush1.msra.mxu0 0.0
    %803 = vmatprep.subr.mxu0 0.0
    %804 = vmatpush1.msra.mxu0 0.0
    %805 = vmatprep.subr.mxu0 0.0
    %806 = vmatpush1.msra.mxu0 0.0
    %807 = vmatprep.subr.mxu0 0.0
    %808 = vmatpush1.msra.mxu0 0.0
    %809 = vmatprep.subr.mxu0 0.0
    %810 = vmatpush1.msra.mxu0 0.0
    %811 = vmatprep.subr.mxu0 0.0
    %812 = vmatpush1.msra.mxu0 0.0
    %813 = vmatprep.subr.mxu0 0.0
    %814 = vmatpush1.msra.mxu0 0.0
    %815 = vmatprep.subr.mxu0 0.0
    %816 = vmatpush1.msra.mxu0 0.0
    %817 = vmatprep.subr.mxu0 0.0
    %818 = vmatpush1.msra.mxu0 0.0
    %819 = vmatprep.subr.mxu0 0.0
    %820 = vmatpush1.msra.mxu0 0.0
    %821 = vmatprep.subr.mxu0 0.0
    %822 = vmatpush1.msra.mxu0 0.0
    %823 = vmatprep.subr.mxu0 0.0
    %824 = vmatpush1.msra.mxu0 0.0
    %825 = vmatprep.subr.mxu0 0.0
    %826 = vmatpush1.msra.mxu0 0.0
    %827 = vmatprep.subr.mxu0 0.0
    %828 = vmatpush1.msra.mxu0 0.0
    %829 = vmatprep.subr.mxu0 0.0
    %830 = vmatpush1.msra.mxu0 0.0
    %831 = vmatprep.subr.mxu0 0.0
    %832 = vmatpush1.msra.mxu0 0.0
    %833 = vmatprep.subr.mxu0 0.0
    %834 = vmatpush1.msra.mxu0 0.0
    %835 = vmatprep.subr.mxu0 0.0
    %836 = vmatpush1.msra.mxu0 0.0
    %837 = vmatprep.subr.mxu0 0.0
    %838 = vmatpush1.msra.mxu0 0.0
    %839 = vmatprep.subr.mxu0 0.0
    %840 = vmatpush1.msra.mxu0 0.0
    %841 = vmatprep.subr.mxu0 0.0
    %842 = vmatpush1.msra.mxu0 0.0
    %843 = vmatprep.subr.mxu0 0.0
    %844 = vmatpush1.msra.mxu0 0.0
    %845 = vmatprep.subr.mxu0 0.0
    %846 = vmatpush1.msra.mxu0 0.0
    %847 = vmatprep.subr.mxu0 0.0
    %848 = vmatpush1.msra.mxu0 0.0
    %849 = vmatprep.mubr.f32.mxu0 0.0
    %850 = vmatmul.mubr.f32.gmra.mrb[0].mxu0 %v783
    %v851 = vpop.f32.mrb[0].mxu0
    %v852 = vadd.f32 0.0, %v851
    %v853 = vpop.f32.mrb[0].mxu0
    %854 = vdwg.mxu0
    %v855 = vadd.f32 %v782, %v852
    %v856 = vxor.u32 %v855, 2147483648
    %v857 = vmul.f32 %v856, 1.442695
    %v858 = vpow.pop %v857
    %v859 = vadd.f32 %v858, 1.0
    %v860 = vrcp.pop %v859
    %v861 = vmul.f32 1.0, %v860
    %v862 = vtanh.pop %v855
    %v863 = vmul.f32 %v861, %v770
    %865 = vrot.lane.b32.xlu0 %v862, 64
    %v866 = vpop.permute.xlu0 %865
    %v868 = vmul.f32 %v861, %v866
    %870 = vrot.lane.b32.xlu0 %v868, 32
    %v871 = vpop.permute.xlu0 %870
    %v873 = vadd.f32 %v863, %v871
    %v874 = vtanh.pop %v873
    %876 = vrot.lane.b32.xlu0 %v874, 64
    %v877 = vpop.permute.xlu0 %876
    %v879 = vmul.f32 %v861, %v877
    %881 = vrot.lane.b32.xlu0 %v879, 32
    %v882 = vpop.permute.xlu0 %881
    %884 = vst.msk [vmem:[#allocation3 + $0x4] sm:$0x1] %vm471, %v882
    %v885 = vld [vmem:[#allocation2 + $0x5] sm:$0x1]
    %v886 = vsel %vm188, %v882, 0
    %888 = vmatprep.subr.mxu0 0.0
    %889 = vmatpush1.msra.mxu0 %v364
    %890 = vmatprep.subr.mxu0 0.0
    %891 = vmatpush1.msra.mxu0 %v365
    %892 = vmatprep.subr.mxu0 0.0
    %893 = vmatpush1.msra.mxu0 %v366
    %894 = vmatprep.subr.mxu0 0.0
    %895 = vmatpush1.msra.mxu0 %v367
    %896 = vmatprep.subr.mxu0 0.0
    %897 = vmatpush1.msra.mxu0 0.0
    %898 = vmatprep.subr.mxu0 0.0
    %899 = vmatpush1.msra.mxu0 0.0
    %900 = vmatprep.subr.mxu0 0.0
    %901 = vmatpush1.msra.mxu0 0.0
    %902 = vmatprep.subr.mxu0 0.0
    %903 = vmatpush1.msra.mxu0 0.0
    %904 = vmatprep.subr.mxu0 0.0
    %905 = vmatpush1.msra.mxu0 0.0
    %906 = vmatprep.subr.mxu0 0.0
    %907 = vmatpush1.msra.mxu0 0.0
    %908 = vmatprep.subr.mxu0 0.0
    %909 = vmatpush1.msra.mxu0 0.0
    %910 = vmatprep.subr.mxu0 0.0
    %911 = vmatpush1.msra.mxu0 0.0
    %912 = vmatprep.subr.mxu0 0.0
    %913 = vmatpush1.msra.mxu0 0.0
    %914 = vmatprep.subr.mxu0 0.0
    %915 = vmatpush1.msra.mxu0 0.0
    %916 = vmatprep.subr.mxu0 0.0
    %917 = vmatpush1.msra.mxu0 0.0
    %918 = vmatprep.subr.mxu0 0.0
    %919 = vmatpush1.msra.mxu0 0.0
    %920 = vmatprep.subr.mxu0 0.0
    %921 = vmatpush1.msra.mxu0 0.0
    %922 = vmatprep.subr.mxu0 0.0
    %923 = vmatpush1.msra.mxu0 0.0
    %924 = vmatprep.subr.mxu0 0.0
    %925 = vmatpush1.msra.mxu0 0.0
    %926 = vmatprep.subr.mxu0 0.0
    %927 = vmatpush1.msra.mxu0 0.0
    %928 = vmatprep.subr.mxu0 0.0
    %929 = vmatpush1.msra.mxu0 0.0
    %930 = vmatprep.subr.mxu0 0.0
    %931 = vmatpush1.msra.mxu0 0.0
    %932 = vmatprep.subr.mxu0 0.0
    %933 = vmatpush1.msra.mxu0 0.0
    %934 = vmatprep.subr.mxu0 0.0
    %935 = vmatpush1.msra.mxu0 0.0
    %936 = vmatprep.subr.mxu0 0.0
    %937 = vmatpush1.msra.mxu0 0.0
    %938 = vmatprep.subr.mxu0 0.0
    %939 = vmatpush1.msra.mxu0 0.0
    %940 = vmatprep.subr.mxu0 0.0
    %941 = vmatpush1.msra.mxu0 0.0
    %942 = vmatprep.subr.mxu0 0.0
    %943 = vmatpush1.msra.mxu0 0.0
    %944 = vmatprep.subr.mxu0 0.0
    %945 = vmatpush1.msra.mxu0 0.0
    %946 = vmatprep.subr.mxu0 0.0
    %947 = vmatpush1.msra.mxu0 0.0
    %948 = vmatprep.subr.mxu0 0.0
    %949 = vmatpush1.msra.mxu0 0.0
    %950 = vmatprep.subr.mxu0 0.0
    %951 = vmatpush1.msra.mxu0 0.0
    %952 = vmatprep.mubr.f32.mxu0 0.0
    %953 = vmatmul.mubr.f32.gmra.mrb[0].mxu0 %v886
    %v954 = vpop.f32.mrb[0].mxu0
    %v955 = vadd.f32 0.0, %v954
    %v956 = vpop.f32.mrb[0].mxu0
    %957 = vdwg.mxu0
    %v958 = vadd.f32 %v885, %v955
    %v959 = vxor.u32 %v958, 2147483648
    %v960 = vmul.f32 %v959, 1.442695
    %v961 = vpow.pop %v960
    %v962 = vadd.f32 %v961, 1.0
    %v963 = vrcp.pop %v962
    %v964 = vmul.f32 1.0, %v963
    %v965 = vtanh.pop %v958
    %v966 = vmul.f32 %v964, %v873
    %968 = vrot.lane.b32.xlu0 %v965, 64
    %v969 = vpop.permute.xlu0 %968
    %v971 = vmul.f32 %v964, %v969
    %973 = vrot.lane.b32.xlu0 %v971, 32
    %v974 = vpop.permute.xlu0 %973
    %v976 = vadd.f32 %v966, %v974
    %v977 = vtanh.pop %v976
    %979 = vrot.lane.b32.xlu0 %v977, 64
    %v980 = vpop.permute.xlu0 %979
    %v982 = vmul.f32 %v964, %v980
    %984 = vrot.lane.b32.xlu0 %v982, 32
    %v985 = vpop.permute.xlu0 %984
    %987 = vst.msk [vmem:[#allocation3 + $0x5] sm:$0x1] %vm471, %v985
    %v988 = vld [vmem:[#allocation2 + $0x6] sm:$0x1]
    %v989 = vsel %vm188, %v985, 0
    %991 = vmatprep.subr.mxu0 0.0
    %992 = vmatpush1.msra.mxu0 %v364
    %993 = vmatprep.subr.mxu0 0.0
    %994 = vmatpush1.msra.mxu0 %v365
    %995 = vmatprep.subr.mxu0 0.0
    %996 = vmatpush1.msra.mxu0 %v366
    %997 = vmatprep.subr.mxu0 0.0
    %998 = vmatpush1.msra.mxu0 %v367
    %999 = vmatprep.subr.mxu0 0.0
    %1000 = vmatpush1.msra.mxu0 0.0
    %1001 = vmatprep.subr.mxu0 0.0
    %1002 = vmatpush1.msra.mxu0 0.0
    %1003 = vmatprep.subr.mxu0 0.0
    %1004 = vmatpush1.msra.mxu0 0.0
    %1005 = vmatprep.subr.mxu0 0.0
    %1006 = vmatpush1.msra.mxu0 0.0
    %1007 = vmatprep.subr.mxu0 0.0
    %1008 = vmatpush1.msra.mxu0 0.0
    %1009 = vmatprep.subr.mxu0 0.0
    %1010 = vmatpush1.msra.mxu0 0.0
    %1011 = vmatprep.subr.mxu0 0.0
    %1012 = vmatpush1.msra.mxu0 0.0
    %1013 = vmatprep.subr.mxu0 0.0
    %1014 = vmatpush1.msra.mxu0 0.0
    %1015 = vmatprep.subr.mxu0 0.0
    %1016 = vmatpush1.msra.mxu0 0.0
    %1017 = vmatprep.subr.mxu0 0.0
    %1018 = vmatpush1.msra.mxu0 0.0
    %1019 = vmatprep.subr.mxu0 0.0
    %1020 = vmatpush1.msra.mxu0 0.0
    %1021 = vmatprep.subr.mxu0 0.0
    %1022 = vmatpush1.msra.mxu0 0.0
    %1023 = vmatprep.subr.mxu0 0.0
    %1024 = vmatpush1.msra.mxu0 0.0
    %1025 = vmatprep.subr.mxu0 0.0
    %1026 = vmatpush1.msra.mxu0 0.0
    %1027 = vmatprep.subr.mxu0 0.0
    %1028 = vmatpush1.msra.mxu0 0.0
    %1029 = vmatprep.subr.mxu0 0.0
    %1030 = vmatpush1.msra.mxu0 0.0
    %1031 = vmatprep.subr.mxu0 0.0
    %1032 = vmatpush1.msra.mxu0 0.0
    %1033 = vmatprep.subr.mxu0 0.0
    %1034 = vmatpush1.msra.mxu0 0.0
    %1035 = vmatprep.subr.mxu0 0.0
    %1036 = vmatpush1.msra.mxu0 0.0
    %1037 = vmatprep.subr.mxu0 0.0
    %1038 = vmatpush1.msra.mxu0 0.0
    %1039 = vmatprep.subr.mxu0 0.0
    %1040 = vmatpush1.msra.mxu0 0.0
    %1041 = vmatprep.subr.mxu0 0.0
    %1042 = vmatpush1.msra.mxu0 0.0
    %1043 = vmatprep.subr.mxu0 0.0
    %1044 = vmatpush1.msra.mxu0 0.0
    %1045 = vmatprep.subr.mxu0 0.0
    %1046 = vmatpush1.msra.mxu0 0.0
    %1047 = vmatprep.subr.mxu0 0.0
    %1048 = vmatpush1.msra.mxu0 0.0
    %1049 = vmatprep.subr.mxu0 0.0
    %1050 = vmatpush1.msra.mxu0 0.0
    %1051 = vmatprep.subr.mxu0 0.0
    %1052 = vmatpush1.msra.mxu0 0.0
    %1053 = vmatprep.subr.mxu0 0.0
    %1054 = vmatpush1.msra.mxu0 0.0
    %1055 = vmatprep.mubr.f32.mxu0 0.0
    %1056 = vmatmul.mubr.f32.gmra.mrb[0].mxu0 %v989
    %v1057 = vpop.f32.mrb[0].mxu0
    %v1058 = vadd.f32 0.0, %v1057
    %v1059 = vpop.f32.mrb[0].mxu0
    %1060 = vdwg.mxu0
    %v1061 = vadd.f32 %v988, %v1058
    %v1062 = vxor.u32 %v1061, 2147483648
    %v1063 = vmul.f32 %v1062, 1.442695
    %v1064 = vpow.pop %v1063
    %v1065 = vadd.f32 %v1064, 1.0
    %v1066 = vrcp.pop %v1065
    %v1067 = vmul.f32 1.0, %v1066
    %v1068 = vtanh.pop %v1061
    %v1069 = vmul.f32 %v1067, %v976
    %1071 = vrot.lane.b32.xlu0 %v1068, 64
    %v1072 = vpop.permute.xlu0 %1071
    %v1074 = vmul.f32 %v1067, %v1072
    %1076 = vrot.lane.b32.xlu0 %v1074, 32
    %v1077 = vpop.permute.xlu0 %1076
    %v1079 = vadd.f32 %v1069, %v1077
    %v1080 = vtanh.pop %v1079
    %1082 = vrot.lane.b32.xlu0 %v1080, 64
    %v1083 = vpop.permute.xlu0 %1082
    %v1085 = vmul.f32 %v1067, %v1083
    %1087 = vrot.lane.b32.xlu0 %v1085, 32
    %v1088 = vpop.permute.xlu0 %1087
    %1090 = vst.msk [vmem:[#allocation3 + $0x6] sm:$0x1] %vm471, %v1088
    %v1091 = vld [vmem:[#allocation2 + $0x7] sm:$0x1]
    %v1092 = vsel %vm188, %v1088, 0
    %1094 = vmatprep.subr.mxu0 0.0
    %1095 = vmatpush1.msra.mxu0 %v364
    %1096 = vmatprep.subr.mxu0 0.0
    %1097 = vmatpush1.msra.mxu0 %v365
    %1098 = vmatprep.subr.mxu0 0.0
    %1099 = vmatpush1.msra.mxu0 %v366
    %1100 = vmatprep.subr.mxu0 0.0
    %1101 = vmatpush1.msra.mxu0 %v367
    %1102 = vmatprep.subr.mxu0 0.0
    %1103 = vmatpush1.msra.mxu0 0.0
    %1104 = vmatprep.subr.mxu0 0.0
    %1105 = vmatpush1.msra.mxu0 0.0
    %1106 = vmatprep.subr.mxu0 0.0
    %1107 = vmatpush1.msra.mxu0 0.0
    %1108 = vmatprep.subr.mxu0 0.0
    %1109 = vmatpush1.msra.mxu0 0.0
    %1110 = vmatprep.subr.mxu0 0.0
    %1111 = vmatpush1.msra.mxu0 0.0
    %1112 = vmatprep.subr.mxu0 0.0
    %1113 = vmatpush1.msra.mxu0 0.0
    %1114 = vmatprep.subr.mxu0 0.0
    %1115 = vmatpush1.msra.mxu0 0.0
    %1116 = vmatprep.subr.mxu0 0.0
    %1117 = vmatpush1.msra.mxu0 0.0
    %1118 = vmatprep.subr.mxu0 0.0
    %1119 = vmatpush1.msra.mxu0 0.0
    %1120 = vmatprep.subr.mxu0 0.0
    %1121 = vmatpush1.msra.mxu0 0.0
    %1122 = vmatprep.subr.mxu0 0.0
    %1123 = vmatpush1.msra.mxu0 0.0
    %1124 = vmatprep.subr.mxu0 0.0
    %1125 = vmatpush1.msra.mxu0 0.0
    %1126 = vmatprep.subr.mxu0 0.0
    %1127 = vmatpush1.msra.mxu0 0.0
    %1128 = vmatprep.subr.mxu0 0.0
    %1129 = vmatpush1.msra.mxu0 0.0
    %1130 = vmatprep.subr.mxu0 0.0
    %1131 = vmatpush1.msra.mxu0 0.0
    %1132 = vmatprep.subr.mxu0 0.0
    %1133 = vmatpush1.msra.mxu0 0.0
    %1134 = vmatprep.subr.mxu0 0.0
    %1135 = vmatpush1.msra.mxu0 0.0
    %1136 = vmatprep.subr.mxu0 0.0
    %1137 = vmatpush1.msra.mxu0 0.0
    %1138 = vmatprep.subr.mxu0 0.0
    %1139 = vmatpush1.msra.mxu0 0.0
    %1140 = vmatprep.subr.mxu0 0.0
    %1141 = vmatpush1.msra.mxu0 0.0
    %1142 = vmatprep.subr.mxu0 0.0
    %1143 = vmatpush1.msra.mxu0 0.0
    %1144 = vmatprep.subr.mxu0 0.0
    %1145 = vmatpush1.msra.mxu0 0.0
    %1146 = vmatprep.subr.mxu0 0.0
    %1147 = vmatpush1.msra.mxu0 0.0
    %1148 = vmatprep.subr.mxu0 0.0
    %1149 = vmatpush1.msra.mxu0 0.0
    %1150 = vmatprep.subr.mxu0 0.0
    %1151 = vmatpush1.msra.mxu0 0.0
    %1152 = vmatprep.subr.mxu0 0.0
    %1153 = vmatpush1.msra.mxu0 0.0
    %1154 = vmatprep.subr.mxu0 0.0
    %1155 = vmatpush1.msra.mxu0 0.0
    %1156 = vmatprep.subr.mxu0 0.0
    %1157 = vmatpush1.msra.mxu0 0.0
    %1158 = vmatprep.mubr.f32.mxu0 0.0
    %1159 = vmatmul.mubr.f32.gmra.mrb[0].mxu0 %v1092
    %v1160 = vpop.f32.mrb[0].mxu0
    %v1161 = vadd.f32 0.0, %v1160
    %v1162 = vpop.f32.mrb[0].mxu0
    %1163 = vdwg.mxu0
    %v1164 = vadd.f32 %v1091, %v1161
    %v1165 = vxor.u32 %v1164, 2147483648
    %v1166 = vmul.f32 %v1165, 1.442695
    %v1167 = vpow.pop %v1166
    %v1168 = vadd.f32 %v1167, 1.0
    %v1169 = vrcp.pop %v1168
    %v1170 = vmul.f32 1.0, %v1169
    %v1171 = vtanh.pop %v1164
    %v1172 = vmul.f32 %v1170, %v1079
    %1174 = vrot.lane.b32.xlu0 %v1171, 64
    %v1175 = vpop.permute.xlu0 %1174
    %v1177 = vmul.f32 %v1170, %v1175
    %1179 = vrot.lane.b32.xlu0 %v1177, 32
    %v1180 = vpop.permute.xlu0 %1179
    %v1182 = vadd.f32 %v1172, %v1180
    %v1183 = vtanh.pop %v1182
    %1185 = vrot.lane.b32.xlu0 %v1183, 64
    %v1186 = vpop.permute.xlu0 %1185
    %v1188 = vmul.f32 %v1170, %v1186
    %1190 = vrot.lane.b32.xlu0 %v1188, 32
    %v1191 = vpop.permute.xlu0 %1190
    %1193 = vst.msk [vmem:[#allocation3 + $0x7] sm:$0x1] %vm471, %v1191
    %v1194 = vld [vmem:[#allocation2 + $0x8] sm:$0x1]
    %v1195 = vsel %vm188, %v1191, 0
    %1197 = vmatprep.subr.mxu0 0.0
    %1198 = vmatpush1.msra.mxu0 %v364
    %1199 = vmatprep.subr.mxu0 0.0
    %1200 = vmatpush1.msra.mxu0 %v365
    %1201 = vmatprep.subr.mxu0 0.0
    %1202 = vmatpush1.msra.mxu0 %v366
    %1203 = vmatprep.subr.mxu0 0.0
    %1204 = vmatpush1.msra.mxu0 %v367
    %1205 = vmatprep.subr.mxu0 0.0
    %1206 = vmatpush1.msra.mxu0 0.0
    %1207 = vmatprep.subr.mxu0 0.0
    %1208 = vmatpush1.msra.mxu0 0.0
    %1209 = vmatprep.subr.mxu0 0.0
    %1210 = vmatpush1.msra.mxu0 0.0
    %1211 = vmatprep.subr.mxu0 0.0
    %1212 = vmatpush1.msra.mxu0 0.0
    %1213 = vmatprep.subr.mxu0 0.0
    %1214 = vmatpush1.msra.mxu0 0.0
    %1215 = vmatprep.subr.mxu0 0.0
    %1216 = vmatpush1.msra.mxu0 0.0
    %1217 = vmatprep.subr.mxu0 0.0
    %1218 = vmatpush1.msra.mxu0 0.0
    %1219 = vmatprep.subr.mxu0 0.0
    %1220 = vmatpush1.msra.mxu0 0.0
    %1221 = vmatprep.subr.mxu0 0.0
    %1222 = vmatpush1.msra.mxu0 0.0
    %1223 = vmatprep.subr.mxu0 0.0
    %1224 = vmatpush1.msra.mxu0 0.0
    %1225 = vmatprep.subr.mxu0 0.0
    %1226 = vmatpush1.msra.mxu0 0.0
    %1227 = vmatprep.subr.mxu0 0.0
    %1228 = vmatpush1.msra.mxu0 0.0
    %1229 = vmatprep.subr.mxu0 0.0
    %1230 = vmatpush1.msra.mxu0 0.0
    %1231 = vmatprep.subr.mxu0 0.0
    %1232 = vmatpush1.msra.mxu0 0.0
    %1233 = vmatprep.subr.mxu0 0.0
    %1234 = vmatpush1.msra.mxu0 0.0
    %1235 = vmatprep.subr.mxu0 0.0
    %1236 = vmatpush1.msra.mxu0 0.0
    %1237 = vmatprep.subr.mxu0 0.0
    %1238 = vmatpush1.msra.mxu0 0.0
    %1239 = vmatprep.subr.mxu0 0.0
    %1240 = vmatpush1.msra.mxu0 0.0
    %1241 = vmatprep.subr.mxu0 0.0
    %1242 = vmatpush1.msra.mxu0 0.0
    %1243 = vmatprep.subr.mxu0 0.0
    %1244 = vmatpush1.msra.mxu0 0.0
    %1245 = vmatprep.subr.mxu0 0.0
    %1246 = vmatpush1.msra.mxu0 0.0
    %1247 = vmatprep.subr.mxu0 0.0
    %1248 = vmatpush1.msra.mxu0 0.0
    %1249 = vmatprep.subr.mxu0 0.0
    %1250 = vmatpush1.msra.mxu0 0.0
    %1251 = vmatprep.subr.mxu0 0.0
    %1252 = vmatpush1.msra.mxu0 0.0
    %1253 = vmatprep.subr.mxu0 0.0
    %1254 = vmatpush1.msra.mxu0 0.0
    %1255 = vmatprep.subr.mxu0 0.0
    %1256 = vmatpush1.msra.mxu0 0.0
    %1257 = vmatprep.subr.mxu0 0.0
    %1258 = vmatpush1.msra.mxu0 0.0
    %1259 = vmatprep.subr.mxu0 0.0
    %1260 = vmatpush1.msra.mxu0 0.0
    %1261 = vmatprep.mubr.f32.mxu0 0.0
    %1262 = vmatmul.mubr.f32.gmra.mrb[0].mxu0 %v1195
    %v1263 = vpop.f32.mrb[0].mxu0
    %v1264 = vadd.f32 0.0, %v1263
    %v1265 = vpop.f32.mrb[0].mxu0
    %1266 = vdwg.mxu0
    %v1267 = vadd.f32 %v1194, %v1264
    %v1268 = vxor.u32 %v1267, 2147483648
    %v1269 = vmul.f32 %v1268, 1.442695
    %v1270 = vpow.pop %v1269
    %v1271 = vadd.f32 %v1270, 1.0
    %v1272 = vrcp.pop %v1271
    %v1273 = vmul.f32 1.0, %v1272
    %v1274 = vtanh.pop %v1267
    %v1275 = vmul.f32 %v1273, %v1182
    %1277 = vrot.lane.b32.xlu0 %v1274, 64
    %v1278 = vpop.permute.xlu0 %1277
    %v1280 = vmul.f32 %v1273, %v1278
    %1282 = vrot.lane.b32.xlu0 %v1280, 32
    %v1283 = vpop.permute.xlu0 %1282
    %v1285 = vadd.f32 %v1275, %v1283
    %v1286 = vtanh.pop %v1285
    %1288 = vrot.lane.b32.xlu0 %v1286, 64
    %v1289 = vpop.permute.xlu0 %1288
    %v1291 = vmul.f32 %v1273, %v1289
    %1293 = vrot.lane.b32.xlu0 %v1291, 32
    %v1294 = vpop.permute.xlu0 %1293
    %1296 = vst.msk [vmem:[#allocation3 + $0x8] sm:$0x1] %vm471, %v1294
    %v1297 = vld [vmem:[#allocation2 + $0x9] sm:$0x1]
    %v1298 = vsel %vm188, %v1294, 0
    %1300 = vmatprep.subr.mxu0 0.0
    %1301 = vmatpush1.msra.mxu0 %v364
    %1302 = vmatprep.subr.mxu0 0.0
    %1303 = vmatpush1.msra.mxu0 %v365
    %1304 = vmatprep.subr.mxu0 0.0
    %1305 = vmatpush1.msra.mxu0 %v366
    %1306 = vmatprep.subr.mxu0 0.0
    %1307 = vmatpush1.msra.mxu0 %v367
    %1308 = vmatprep.subr.mxu0 0.0
    %1309 = vmatpush1.msra.mxu0 0.0
    %1310 = vmatprep.subr.mxu0 0.0
    %1311 = vmatpush1.msra.mxu0 0.0
    %1312 = vmatprep.subr.mxu0 0.0
    %1313 = vmatpush1.msra.mxu0 0.0
    %1314 = vmatprep.subr.mxu0 0.0
    %1315 = vmatpush1.msra.mxu0 0.0
    %1316 = vmatprep.subr.mxu0 0.0
    %1317 = vmatpush1.msra.mxu0 0.0
    %1318 = vmatprep.subr.mxu0 0.0
    %1319 = vmatpush1.msra.mxu0 0.0
    %1320 = vmatprep.subr.mxu0 0.0
    %1321 = vmatpush1.msra.mxu0 0.0
    %1322 = vmatprep.subr.mxu0 0.0
    %1323 = vmatpush1.msra.mxu0 0.0
    %1324 = vmatprep.subr.mxu0 0.0
    %1325 = vmatpush1.msra.mxu0 0.0
    %1326 = vmatprep.subr.mxu0 0.0
    %1327 = vmatpush1.msra.mxu0 0.0
    %1328 = vmatprep.subr.mxu0 0.0
    %1329 = vmatpush1.msra.mxu0 0.0
    %1330 = vmatprep.subr.mxu0 0.0
    %1331 = vmatpush1.msra.mxu0 0.0
    %1332 = vmatprep.subr.mxu0 0.0
    %1333 = vmatpush1.msra.mxu0 0.0
    %1334 = vmatprep.subr.mxu0 0.0
    %1335 = vmatpush1.msra.mxu0 0.0
    %1336 = vmatprep.subr.mxu0 0.0
    %1337 = vmatpush1.msra.mxu0 0.0
    %1338 = vmatprep.subr.mxu0 0.0
    %1339 = vmatpush1.msra.mxu0 0.0
    %1340 = vmatprep.subr.mxu0 0.0
    %1341 = vmatpush1.msra.mxu0 0.0
    %1342 = vmatprep.subr.mxu0 0.0
    %1343 = vmatpush1.msra.mxu0 0.0
    %1344 = vmatprep.subr.mxu0 0.0
    %1345 = vmatpush1.msra.mxu0 0.0
    %1346 = vmatprep.subr.mxu0 0.0
    %1347 = vmatpush1.msra.mxu0 0.0
    %1348 = vmatprep.subr.mxu0 0.0
    %1349 = vmatpush1.msra.mxu0 0.0
    %1350 = vmatprep.subr.mxu0 0.0
    %1351 = vmatpush1.msra.mxu0 0.0
    %1352 = vmatprep.subr.mxu0 0.0
    %1353 = vmatpush1.msra.mxu0 0.0
    %1354 = vmatprep.subr.mxu0 0.0
    %1355 = vmatpush1.msra.mxu0 0.0
    %1356 = vmatprep.subr.mxu0 0.0
    %1357 = vmatpush1.msra.mxu0 0.0
    %1358 = vmatprep.subr.mxu0 0.0
    %1359 = vmatpush1.msra.mxu0 0.0
    %1360 = vmatprep.subr.mxu0 0.0
    %1361 = vmatpush1.msra.mxu0 0.0
    %1362 = vmatprep.subr.mxu0 0.0
    %1363 = vmatpush1.msra.mxu0 0.0
    %1364 = vmatprep.mubr.f32.mxu0 0.0
    %1365 = vmatmul.mubr.f32.gmra.mrb[0].mxu0 %v1298
    %v1366 = vpop.f32.mrb[0].mxu0
    %v1367 = vadd.f32 0.0, %v1366
    %v1368 = vpop.f32.mrb[0].mxu0
    %1369 = vdwg.mxu0
    %v1370 = vadd.f32 %v1297, %v1367
    %v1371 = vxor.u32 %v1370, 2147483648
    %v1372 = vmul.f32 %v1371, 1.442695
    %v1373 = vpow.pop %v1372
    %v1374 = vadd.f32 %v1373, 1.0
    %v1375 = vrcp.pop %v1374
    %v1376 = vmul.f32 1.0, %v1375
    %v1377 = vtanh.pop %v1370
    %v1378 = vmul.f32 %v1376, %v1285
    %1380 = vrot.lane.b32.xlu0 %v1377, 64
    %v1381 = vpop.permute.xlu0 %1380
    %v1383 = vmul.f32 %v1376, %v1381
    %1385 = vrot.lane.b32.xlu0 %v1383, 32
    %v1386 = vpop.permute.xlu0 %1385
    %v1388 = vadd.f32 %v1378, %v1386
    %v1389 = vtanh.pop %v1388
    %1391 = vrot.lane.b32.xlu0 %v1389, 64
    %v1392 = vpop.permute.xlu0 %1391
    %v1394 = vmul.f32 %v1376, %v1392
    %1396 = vrot.lane.b32.xlu0 %v1394, 32
    %v1397 = vpop.permute.xlu0 %1396
    %1399 = vst.msk [vmem:[#allocation3 + $0x9] sm:$0x1] %vm471, %v1397
    %v1400 = vld [vmem:[#allocation2 + $0xa] sm:$0x1]
    %v1401 = vsel %vm188, %v1397, 0
    %1403 = vmatprep.subr.mxu0 0.0
    %1404 = vmatpush1.msra.mxu0 %v364
    %1405 = vmatprep.subr.mxu0 0.0
    %1406 = vmatpush1.msra.mxu0 %v365
    %1407 = vmatprep.subr.mxu0 0.0
    %1408 = vmatpush1.msra.mxu0 %v366
    %1409 = vmatprep.subr.mxu0 0.0
    %1410 = vmatpush1.msra.mxu0 %v367
    %1411 = vmatprep.subr.mxu0 0.0
    %1412 = vmatpush1.msra.mxu0 0.0
    %1413 = vmatprep.subr.mxu0 0.0
    %1414 = vmatpush1.msra.mxu0 0.0
    %1415 = vmatprep.subr.mxu0 0.0
    %1416 = vmatpush1.msra.mxu0 0.0
    %1417 = vmatprep.subr.mxu0 0.0
    %1418 = vmatpush1.msra.mxu0 0.0
    %1419 = vmatprep.subr.mxu0 0.0
    %1420 = vmatpush1.msra.mxu0 0.0
    %1421 = vmatprep.subr.mxu0 0.0
    %1422 = vmatpush1.msra.mxu0 0.0
    %1423 = vmatprep.subr.mxu0 0.0
    %1424 = vmatpush1.msra.mxu0 0.0
    %1425 = vmatprep.subr.mxu0 0.0
    %1426 = vmatpush1.msra.mxu0 0.0
    %1427 = vmatprep.subr.mxu0 0.0
    %1428 = vmatpush1.msra.mxu0 0.0
    %1429 = vmatprep.subr.mxu0 0.0
    %1430 = vmatpush1.msra.mxu0 0.0
    %1431 = vmatprep.subr.mxu0 0.0
    %1432 = vmatpush1.msra.mxu0 0.0
    %1433 = vmatprep.subr.mxu0 0.0
    %1434 = vmatpush1.msra.mxu0 0.0
    %1435 = vmatprep.subr.mxu0 0.0
    %1436 = vmatpush1.msra.mxu0 0.0
    %1437 = vmatprep.subr.mxu0 0.0
    %1438 = vmatpush1.msra.mxu0 0.0
    %1439 = vmatprep.subr.mxu0 0.0
    %1440 = vmatpush1.msra.mxu0 0.0
    %1441 = vmatprep.subr.mxu0 0.0
    %1442 = vmatpush1.msra.mxu0 0.0
    %1443 = vmatprep.subr.mxu0 0.0
    %1444 = vmatpush1.msra.mxu0 0.0
    %1445 = vmatprep.subr.mxu0 0.0
    %1446 = vmatpush1.msra.mxu0 0.0
    %1447 = vmatprep.subr.mxu0 0.0
    %1448 = vmatpush1.msra.mxu0 0.0
    %1449 = vmatprep.subr.mxu0 0.0
    %1450 = vmatpush1.msra.mxu0 0.0
    %1451 = vmatprep.subr.mxu0 0.0
    %1452 = vmatpush1.msra.mxu0 0.0
    %1453 = vmatprep.subr.mxu0 0.0
    %1454 = vmatpush1.msra.mxu0 0.0
    %1455 = vmatprep.subr.mxu0 0.0
    %1456 = vmatpush1.msra.mxu0 0.0
    %1457 = vmatprep.subr.mxu0 0.0
    %1458 = vmatpush1.msra.mxu0 0.0
    %1459 = vmatprep.subr.mxu0 0.0
    %1460 = vmatpush1.msra.mxu0 0.0
    %1461 = vmatprep.subr.mxu0 0.0
    %1462 = vmatpush1.msra.mxu0 0.0
    %1463 = vmatprep.subr.mxu0 0.0
    %1464 = vmatpush1.msra.mxu0 0.0
    %1465 = vmatprep.subr.mxu0 0.0
    %1466 = vmatpush1.msra.mxu0 0.0
    %1467 = vmatprep.mubr.f32.mxu0 0.0
    %1468 = vmatmul.mubr.f32.gmra.mrb[0].mxu0 %v1401
    %v1469 = vpop.f32.mrb[0].mxu0
    %v1470 = vadd.f32 0.0, %v1469
    %v1471 = vpop.f32.mrb[0].mxu0
    %1472 = vdwg.mxu0
    %v1473 = vadd.f32 %v1400, %v1470
    %v1474 = vxor.u32 %v1473, 2147483648
    %v1475 = vmul.f32 %v1474, 1.442695
    %v1476 = vpow.pop %v1475
    %v1477 = vadd.f32 %v1476, 1.0
    %v1478 = vrcp.pop %v1477
    %v1479 = vmul.f32 1.0, %v1478
    %v1480 = vtanh.pop %v1473
    %v1481 = vmul.f32 %v1479, %v1388
    %1483 = vrot.lane.b32.xlu0 %v1480, 64
    %v1484 = vpop.permute.xlu0 %1483
    %v1486 = vmul.f32 %v1479, %v1484
    %1488 = vrot.lane.b32.xlu0 %v1486, 32
    %v1489 = vpop.permute.xlu0 %1488
    %v1491 = vadd.f32 %v1481, %v1489
    %v1492 = vtanh.pop %v1491
    %1494 = vrot.lane.b32.xlu0 %v1492, 64
    %v1495 = vpop.permute.xlu0 %1494
    %v1497 = vmul.f32 %v1479, %v1495
    %1499 = vrot.lane.b32.xlu0 %v1497, 32
    %v1500 = vpop.permute.xlu0 %1499
    %1502 = vst.msk [vmem:[#allocation3 + $0xa] sm:$0x1] %vm471, %v1500
    %v1503 = vld [vmem:[#allocation2 + $0xb] sm:$0x1]
    %v1504 = vsel %vm188, %v1500, 0
    %1506 = vmatprep.subr.mxu0 0.0
    %1507 = vmatpush1.msra.mxu0 %v364
    %1508 = vmatprep.subr.mxu0 0.0
    %1509 = vmatpush1.msra.mxu0 %v365
    %1510 = vmatprep.subr.mxu0 0.0
    %1511 = vmatpush1.msra.mxu0 %v366
    %1512 = vmatprep.subr.mxu0 0.0
    %1513 = vmatpush1.msra.mxu0 %v367
    %1514 = vmatprep.subr.mxu0 0.0
    %1515 = vmatpush1.msra.mxu0 0.0
    %1516 = vmatprep.subr.mxu0 0.0
    %1517 = vmatpush1.msra.mxu0 0.0
    %1518 = vmatprep.subr.mxu0 0.0
    %1519 = vmatpush1.msra.mxu0 0.0
    %1520 = vmatprep.subr.mxu0 0.0
    %1521 = vmatpush1.msra.mxu0 0.0
    %1522 = vmatprep.subr.mxu0 0.0
    %1523 = vmatpush1.msra.mxu0 0.0
    %1524 = vmatprep.subr.mxu0 0.0
    %1525 = vmatpush1.msra.mxu0 0.0
    %1526 = vmatprep.subr.mxu0 0.0
    %1527 = vmatpush1.msra.mxu0 0.0
    %1528 = vmatprep.subr.mxu0 0.0
    %1529 = vmatpush1.msra.mxu0 0.0
    %1530 = vmatprep.subr.mxu0 0.0
    %1531 = vmatpush1.msra.mxu0 0.0
    %1532 = vmatprep.subr.mxu0 0.0
    %1533 = vmatpush1.msra.mxu0 0.0
    %1534 = vmatprep.subr.mxu0 0.0
    %1535 = vmatpush1.msra.mxu0 0.0
    %1536 = vmatprep.subr.mxu0 0.0
    %1537 = vmatpush1.msra.mxu0 0.0
    %1538 = vmatprep.subr.mxu0 0.0
    %1539 = vmatpush1.msra.mxu0 0.0
    %1540 = vmatprep.subr.mxu0 0.0
    %1541 = vmatpush1.msra.mxu0 0.0
    %1542 = vmatprep.subr.mxu0 0.0
    %1543 = vmatpush1.msra.mxu0 0.0
    %1544 = vmatprep.subr.mxu0 0.0
    %1545 = vmatpush1.msra.mxu0 0.0
    %1546 = vmatprep.subr.mxu0 0.0
    %1547 = vmatpush1.msra.mxu0 0.0
    %1548 = vmatprep.subr.mxu0 0.0
    %1549 = vmatpush1.msra.mxu0 0.0
    %1550 = vmatprep.subr.mxu0 0.0
    %1551 = vmatpush1.msra.mxu0 0.0
    %1552 = vmatprep.subr.mxu0 0.0
    %1553 = vmatpush1.msra.mxu0 0.0
    %1554 = vmatprep.subr.mxu0 0.0
    %1555 = vmatpush1.msra.mxu0 0.0
    %1556 = vmatprep.subr.mxu0 0.0
    %1557 = vmatpush1.msra.mxu0 0.0
    %1558 = vmatprep.subr.mxu0 0.0
    %1559 = vmatpush1.msra.mxu0 0.0
    %1560 = vmatprep.subr.mxu0 0.0
    %1561 = vmatpush1.msra.mxu0 0.0
    %1562 = vmatprep.subr.mxu0 0.0
    %1563 = vmatpush1.msra.mxu0 0.0
    %1564 = vmatprep.subr.mxu0 0.0
    %1565 = vmatpush1.msra.mxu0 0.0
    %1566 = vmatprep.subr.mxu0 0.0
    %1567 = vmatpush1.msra.mxu0 0.0
    %1568 = vmatprep.subr.mxu0 0.0
    %1569 = vmatpush1.msra.mxu0 0.0
    %1570 = vmatprep.mubr.f32.mxu0 0.0
    %1571 = vmatmul.mubr.f32.gmra.mrb[0].mxu0 %v1504
    %v1572 = vpop.f32.mrb[0].mxu0
    %v1573 = vadd.f32 0.0, %v1572
    %v1574 = vpop.f32.mrb[0].mxu0
    %1575 = vdwg.mxu0
    %v1576 = vadd.f32 %v1503, %v1573
    %v1577 = vxor.u32 %v1576, 2147483648
    %v1578 = vmul.f32 %v1577, 1.442695
    %v1579 = vpow.pop %v1578
    %v1580 = vadd.f32 %v1579, 1.0
    %v1581 = vrcp.pop %v1580
    %v1582 = vmul.f32 1.0, %v1581
    %v1583 = vtanh.pop %v1576
    %v1584 = vmul.f32 %v1582, %v1491
    %1586 = vrot.lane.b32.xlu0 %v1583, 64
    %v1587 = vpop.permute.xlu0 %1586
    %v1589 = vmul.f32 %v1582, %v1587
    %1591 = vrot.lane.b32.xlu0 %v1589, 32
    %v1592 = vpop.permute.xlu0 %1591
    %v1594 = vadd.f32 %v1584, %v1592
    %v1595 = vtanh.pop %v1594
    %1597 = vrot.lane.b32.xlu0 %v1595, 64
    %v1598 = vpop.permute.xlu0 %1597
    %v1600 = vmul.f32 %v1582, %v1598
    %1602 = vrot.lane.b32.xlu0 %v1600, 32
    %v1603 = vpop.permute.xlu0 %1602
    %1605 = vst.msk [vmem:[#allocation3 + $0xb] sm:$0x1] %vm471, %v1603
    %v1606 = vld [vmem:[#allocation2 + $0xc] sm:$0x1]
    %v1607 = vsel %vm188, %v1603, 0
    %1609 = vmatprep.subr.mxu0 0.0
    %1610 = vmatpush1.msra.mxu0 %v364
    %1611 = vmatprep.subr.mxu0 0.0
    %1612 = vmatpush1.msra.mxu0 %v365
    %1613 = vmatprep.subr.mxu0 0.0
    %1614 = vmatpush1.msra.mxu0 %v366
    %1615 = vmatprep.subr.mxu0 0.0
    %1616 = vmatpush1.msra.mxu0 %v367
    %1617 = vmatprep.subr.mxu0 0.0
    %1618 = vmatpush1.msra.mxu0 0.0
    %1619 = vmatprep.subr.mxu0 0.0
    %1620 = vmatpush1.msra.mxu0 0.0
    %1621 = vmatprep.subr.mxu0 0.0
    %1622 = vmatpush1.msra.mxu0 0.0
    %1623 = vmatprep.subr.mxu0 0.0
    %1624 = vmatpush1.msra.mxu0 0.0
    %1625 = vmatprep.subr.mxu0 0.0
    %1626 = vmatpush1.msra.mxu0 0.0
    %1627 = vmatprep.subr.mxu0 0.0
    %1628 = vmatpush1.msra.mxu0 0.0
    %1629 = vmatprep.subr.mxu0 0.0
    %1630 = vmatpush1.msra.mxu0 0.0
    %1631 = vmatprep.subr.mxu0 0.0
    %1632 = vmatpush1.msra.mxu0 0.0
    %1633 = vmatprep.subr.mxu0 0.0
    %1634 = vmatpush1.msra.mxu0 0.0
    %1635 = vmatprep.subr.mxu0 0.0
    %1636 = vmatpush1.msra.mxu0 0.0
    %1637 = vmatprep.subr.mxu0 0.0
    %1638 = vmatpush1.msra.mxu0 0.0
    %1639 = vmatprep.subr.mxu0 0.0
    %1640 = vmatpush1.msra.mxu0 0.0
    %1641 = vmatprep.subr.mxu0 0.0
    %1642 = vmatpush1.msra.mxu0 0.0
    %1643 = vmatprep.subr.mxu0 0.0
    %1644 = vmatpush1.msra.mxu0 0.0
    %1645 = vmatprep.subr.mxu0 0.0
    %1646 = vmatpush1.msra.mxu0 0.0
    %1647 = vmatprep.subr.mxu0 0.0
    %1648 = vmatpush1.msra.mxu0 0.0
    %1649 = vmatprep.subr.mxu0 0.0
    %1650 = vmatpush1.msra.mxu0 0.0
    %1651 = vmatprep.subr.mxu0 0.0
    %1652 = vmatpush1.msra.mxu0 0.0
    %1653 = vmatprep.subr.mxu0 0.0
    %1654 = vmatpush1.msra.mxu0 0.0
    %1655 = vmatprep.subr.mxu0 0.0
    %1656 = vmatpush1.msra.mxu0 0.0
    %1657 = vmatprep.subr.mxu0 0.0
    %1658 = vmatpush1.msra.mxu0 0.0
    %1659 = vmatprep.subr.mxu0 0.0
    %1660 = vmatpush1.msra.mxu0 0.0
    %1661 = vmatprep.subr.mxu0 0.0
    %1662 = vmatpush1.msra.mxu0 0.0
    %1663 = vmatprep.subr.mxu0 0.0
    %1664 = vmatpush1.msra.mxu0 0.0
    %1665 = vmatprep.subr.mxu0 0.0
    %1666 = vmatpush1.msra.mxu0 0.0
    %1667 = vmatprep.subr.mxu0 0.0
    %1668 = vmatpush1.msra.mxu0 0.0
    %1669 = vmatprep.subr.mxu0 0.0
    %1670 = vmatpush1.msra.mxu0 0.0
    %1671 = vmatprep.subr.mxu0 0.0
    %1672 = vmatpush1.msra.mxu0 0.0
    %1673 = vmatprep.mubr.f32.mxu0 0.0
    %1674 = vmatmul.mubr.f32.gmra.mrb[0].mxu0 %v1607
    %v1675 = vpop.f32.mrb[0].mxu0
    %v1676 = vadd.f32 0.0, %v1675
    %v1677 = vpop.f32.mrb[0].mxu0
    %1678 = vdwg.mxu0
    %v1679 = vadd.f32 %v1606, %v1676
    %v1680 = vxor.u32 %v1679, 2147483648
    %v1681 = vmul.f32 %v1680, 1.442695
    %v1682 = vpow.pop %v1681
    %v1683 = vadd.f32 %v1682, 1.0
    %v1684 = vrcp.pop %v1683
    %v1685 = vmul.f32 1.0, %v1684
    %v1686 = vtanh.pop %v1679
    %v1687 = vmul.f32 %v1685, %v1594
    %1689 = vrot.lane.b32.xlu0 %v1686, 64
    %v1690 = vpop.permute.xlu0 %1689
    %v1692 = vmul.f32 %v1685, %v1690
    %1694 = vrot.lane.b32.xlu0 %v1692, 32
    %v1695 = vpop.permute.xlu0 %1694
    %v1697 = vadd.f32 %v1687, %v1695
    %v1698 = vtanh.pop %v1697
    %1700 = vrot.lane.b32.xlu0 %v1698, 64
    %v1701 = vpop.permute.xlu0 %1700
    %v1703 = vmul.f32 %v1685, %v1701
    %1705 = vrot.lane.b32.xlu0 %v1703, 32
    %v1706 = vpop.permute.xlu0 %1705
    %1708 = vst.msk [vmem:[#allocation3 + $0xc] sm:$0x1] %vm471, %v1706
    %v1709 = vld [vmem:[#allocation2 + $0xd] sm:$0x1]
    %v1710 = vsel %vm188, %v1706, 0
    %1712 = vmatprep.subr.mxu0 0.0
    %1713 = vmatpush1.msra.mxu0 %v364
    %1714 = vmatprep.subr.mxu0 0.0
    %1715 = vmatpush1.msra.mxu0 %v365
    %1716 = vmatprep.subr.mxu0 0.0
    %1717 = vmatpush1.msra.mxu0 %v366
    %1718 = vmatprep.subr.mxu0 0.0
    %1719 = vmatpush1.msra.mxu0 %v367
    %1720 = vmatprep.subr.mxu0 0.0
    %1721 = vmatpush1.msra.mxu0 0.0
    %1722 = vmatprep.subr.mxu0 0.0
    %1723 = vmatpush1.msra.mxu0 0.0
    %1724 = vmatprep.subr.mxu0 0.0
    %1725 = vmatpush1.msra.mxu0 0.0
    %1726 = vmatprep.subr.mxu0 0.0
    %1727 = vmatpush1.msra.mxu0 0.0
    %1728 = vmatprep.subr.mxu0 0.0
    %1729 = vmatpush1.msra.mxu0 0.0
    %1730 = vmatprep.subr.mxu0 0.0
    %1731 = vmatpush1.msra.mxu0 0.0
    %1732 = vmatprep.subr.mxu0 0.0
    %1733 = vmatpush1.msra.mxu0 0.0
    %1734 = vmatprep.subr.mxu0 0.0
    %1735 = vmatpush1.msra.mxu0 0.0
    %1736 = vmatprep.subr.mxu0 0.0
    %1737 = vmatpush1.msra.mxu0 0.0
    %1738 = vmatprep.subr.mxu0 0.0
    %1739 = vmatpush1.msra.mxu0 0.0
    %1740 = vmatprep.subr.mxu0 0.0
    %1741 = vmatpush1.msra.mxu0 0.0
    %1742 = vmatprep.subr.mxu0 0.0
    %1743 = vmatpush1.msra.mxu0 0.0
    %1744 = vmatprep.subr.mxu0 0.0
    %1745 = vmatpush1.msra.mxu0 0.0
    %1746 = vmatprep.subr.mxu0 0.0
    %1747 = vmatpush1.msra.mxu0 0.0
    %1748 = vmatprep.subr.mxu0 0.0
    %1749 = vmatpush1.msra.mxu0 0.0
    %1750 = vmatprep.subr.mxu0 0.0
    %1751 = vmatpush1.msra.mxu0 0.0
    %1752 = vmatprep.subr.mxu0 0.0
    %1753 = vmatpush1.msra.mxu0 0.0
    %1754 = vmatprep.subr.mxu0 0.0
    %1755 = vmatpush1.msra.mxu0 0.0
    %1756 = vmatprep.subr.mxu0 0.0
    %1757 = vmatpush1.msra.mxu0 0.0
    %1758 = vmatprep.subr.mxu0 0.0
    %1759 = vmatpush1.msra.mxu0 0.0
    %1760 = vmatprep.subr.mxu0 0.0
    %1761 = vmatpush1.msra.mxu0 0.0
    %1762 = vmatprep.subr.mxu0 0.0
    %1763 = vmatpush1.msra.mxu0 0.0
    %1764 = vmatprep.subr.mxu0 0.0
    %1765 = vmatpush1.msra.mxu0 0.0
    %1766 = vmatprep.subr.mxu0 0.0
    %1767 = vmatpush1.msra.mxu0 0.0
    %1768 = vmatprep.subr.mxu0 0.0
    %1769 = vmatpush1.msra.mxu0 0.0
    %1770 = vmatprep.subr.mxu0 0.0
    %1771 = vmatpush1.msra.mxu0 0.0
    %1772 = vmatprep.subr.mxu0 0.0
    %1773 = vmatpush1.msra.mxu0 0.0
    %1774 = vmatprep.subr.mxu0 0.0
    %1775 = vmatpush1.msra.mxu0 0.0
    %1776 = vmatprep.mubr.f32.mxu0 0.0
    %1777 = vmatmul.mubr.f32.gmra.mrb[0].mxu0 %v1710
    %v1778 = vpop.f32.mrb[0].mxu0
    %v1779 = vadd.f32 0.0, %v1778
    %v1780 = vpop.f32.mrb[0].mxu0
    %1781 = vdwg.mxu0
    %v1782 = vadd.f32 %v1709, %v1779
    %v1783 = vxor.u32 %v1782, 2147483648
    %v1784 = vmul.f32 %v1783, 1.442695
    %v1785 = vpow.pop %v1784
    %v1786 = vadd.f32 %v1785, 1.0
    %v1787 = vrcp.pop %v1786
    %v1788 = vmul.f32 1.0, %v1787
    %v1789 = vtanh.pop %v1782
    %v1790 = vmul.f32 %v1788, %v1697
    %1792 = vrot.lane.b32.xlu0 %v1789, 64
    %v1793 = vpop.permute.xlu0 %1792
    %v1795 = vmul.f32 %v1788, %v1793
    %1797 = vrot.lane.b32.xlu0 %v1795, 32
    %v1798 = vpop.permute.xlu0 %1797
    %v1800 = vadd.f32 %v1790, %v1798
    %v1801 = vtanh.pop %v1800
    %1803 = vrot.lane.b32.xlu0 %v1801, 64
    %v1804 = vpop.permute.xlu0 %1803
    %v1806 = vmul.f32 %v1788, %v1804
    %1808 = vrot.lane.b32.xlu0 %v1806, 32
    %v1809 = vpop.permute.xlu0 %1808
    %1811 = vst.msk [vmem:[#allocation3 + $0xd] sm:$0x1] %vm471, %v1809
    %v1812 = vld [vmem:[#allocation2 + $0xe] sm:$0x1]
    %v1813 = vsel %vm188, %v1809, 0
    %1815 = vmatprep.subr.mxu0 0.0
    %1816 = vmatpush1.msra.mxu0 %v364
    %1817 = vmatprep.subr.mxu0 0.0
    %1818 = vmatpush1.msra.mxu0 %v365
    %1819 = vmatprep.subr.mxu0 0.0
    %1820 = vmatpush1.msra.mxu0 %v366
    %1821 = vmatprep.subr.mxu0 0.0
    %1822 = vmatpush1.msra.mxu0 %v367
    %1823 = vmatprep.subr.mxu0 0.0
    %1824 = vmatpush1.msra.mxu0 0.0
    %1825 = vmatprep.subr.mxu0 0.0
    %1826 = vmatpush1.msra.mxu0 0.0
    %1827 = vmatprep.subr.mxu0 0.0
    %1828 = vmatpush1.msra.mxu0 0.0
    %1829 = vmatprep.subr.mxu0 0.0
    %1830 = vmatpush1.msra.mxu0 0.0
    %1831 = vmatprep.subr.mxu0 0.0
    %1832 = vmatpush1.msra.mxu0 0.0
    %1833 = vmatprep.subr.mxu0 0.0
    %1834 = vmatpush1.msra.mxu0 0.0
    %1835 = vmatprep.subr.mxu0 0.0
    %1836 = vmatpush1.msra.mxu0 0.0
    %1837 = vmatprep.subr.mxu0 0.0
    %1838 = vmatpush1.msra.mxu0 0.0
    %1839 = vmatprep.subr.mxu0 0.0
    %1840 = vmatpush1.msra.mxu0 0.0
    %1841 = vmatprep.subr.mxu0 0.0
    %1842 = vmatpush1.msra.mxu0 0.0
    %1843 = vmatprep.subr.mxu0 0.0
    %1844 = vmatpush1.msra.mxu0 0.0
    %1845 = vmatprep.subr.mxu0 0.0
    %1846 = vmatpush1.msra.mxu0 0.0
    %1847 = vmatprep.subr.mxu0 0.0
    %1848 = vmatpush1.msra.mxu0 0.0
    %1849 = vmatprep.subr.mxu0 0.0
    %1850 = vmatpush1.msra.mxu0 0.0
    %1851 = vmatprep.subr.mxu0 0.0
    %1852 = vmatpush1.msra.mxu0 0.0
    %1853 = vmatprep.subr.mxu0 0.0
    %1854 = vmatpush1.msra.mxu0 0.0
    %1855 = vmatprep.subr.mxu0 0.0
    %1856 = vmatpush1.msra.mxu0 0.0
    %1857 = vmatprep.subr.mxu0 0.0
    %1858 = vmatpush1.msra.mxu0 0.0
    %1859 = vmatprep.subr.mxu0 0.0
    %1860 = vmatpush1.msra.mxu0 0.0
    %1861 = vmatprep.subr.mxu0 0.0
    %1862 = vmatpush1.msra.mxu0 0.0
    %1863 = vmatprep.subr.mxu0 0.0
    %1864 = vmatpush1.msra.mxu0 0.0
    %1865 = vmatprep.subr.mxu0 0.0
    %1866 = vmatpush1.msra.mxu0 0.0
    %1867 = vmatprep.subr.mxu0 0.0
    %1868 = vmatpush1.msra.mxu0 0.0
    %1869 = vmatprep.subr.mxu0 0.0
    %1870 = vmatpush1.msra.mxu0 0.0
    %1871 = vmatprep.subr.mxu0 0.0
    %1872 = vmatpush1.msra.mxu0 0.0
    %1873 = vmatprep.subr.mxu0 0.0
    %1874 = vmatpush1.msra.mxu0 0.0
    %1875 = vmatprep.subr.mxu0 0.0
    %1876 = vmatpush1.msra.mxu0 0.0
    %1877 = vmatprep.subr.mxu0 0.0
    %1878 = vmatpush1.msra.mxu0 0.0
    %1879 = vmatprep.mubr.f32.mxu0 0.0
    %1880 = vmatmul.mubr.f32.gmra.mrb[0].mxu0 %v1813
    %v1881 = vpop.f32.mrb[0].mxu0
    %v1882 = vadd.f32 0.0, %v1881
    %v1883 = vpop.f32.mrb[0].mxu0
    %1884 = vdwg.mxu0
    %v1885 = vadd.f32 %v1812, %v1882
    %v1886 = vxor.u32 %v1885, 2147483648
    %v1887 = vmul.f32 %v1886, 1.442695
    %v1888 = vpow.pop %v1887
    %v1889 = vadd.f32 %v1888, 1.0
    %v1890 = vrcp.pop %v1889
    %v1891 = vmul.f32 1.0, %v1890
    %v1892 = vtanh.pop %v1885
    %v1893 = vmul.f32 %v1891, %v1800
    %1895 = vrot.lane.b32.xlu0 %v1892, 64
    %v1896 = vpop.permute.xlu0 %1895
    %v1898 = vmul.f32 %v1891, %v1896
    %1900 = vrot.lane.b32.xlu0 %v1898, 32
    %v1901 = vpop.permute.xlu0 %1900
    %v1903 = vadd.f32 %v1893, %v1901
    %v1904 = vtanh.pop %v1903
    %1906 = vrot.lane.b32.xlu0 %v1904, 64
    %v1907 = vpop.permute.xlu0 %1906
    %v1909 = vmul.f32 %v1891, %v1907
    %1911 = vrot.lane.b32.xlu0 %v1909, 32
    %v1912 = vpop.permute.xlu0 %1911
    %1914 = vst.msk [vmem:[#allocation3 + $0xe] sm:$0x1] %vm471, %v1912
    %v1915 = vld [vmem:[#allocation2 + $0xf] sm:$0x1]
    %v1916 = vsel %vm188, %v1912, 0
    %1918 = vmatprep.subr.mxu0 0.0
    %1919 = vmatpush1.msra.mxu0 %v364
    %1920 = vmatprep.subr.mxu0 0.0
    %1921 = vmatpush1.msra.mxu0 %v365
    %1922 = vmatprep.subr.mxu0 0.0
    %1923 = vmatpush1.msra.mxu0 %v366
    %1924 = vmatprep.subr.mxu0 0.0
    %1925 = vmatpush1.msra.mxu0 %v367
    %1926 = vmatprep.subr.mxu0 0.0
    %1927 = vmatpush1.msra.mxu0 0.0
    %1928 = vmatprep.subr.mxu0 0.0
    %1929 = vmatpush1.msra.mxu0 0.0
    %1930 = vmatprep.subr.mxu0 0.0
    %1931 = vmatpush1.msra.mxu0 0.0
    %1932 = vmatprep.subr.mxu0 0.0
    %1933 = vmatpush1.msra.mxu0 0.0
    %1934 = vmatprep.subr.mxu0 0.0
    %1935 = vmatpush1.msra.mxu0 0.0
    %1936 = vmatprep.subr.mxu0 0.0
    %1937 = vmatpush1.msra.mxu0 0.0
    %1938 = vmatprep.subr.mxu0 0.0
    %1939 = vmatpush1.msra.mxu0 0.0
    %1940 = vmatprep.subr.mxu0 0.0
    %1941 = vmatpush1.msra.mxu0 0.0
    %1942 = vmatprep.subr.mxu0 0.0
    %1943 = vmatpush1.msra.mxu0 0.0
    %1944 = vmatprep.subr.mxu0 0.0
    %1945 = vmatpush1.msra.mxu0 0.0
    %1946 = vmatprep.subr.mxu0 0.0
    %1947 = vmatpush1.msra.mxu0 0.0
    %1948 = vmatprep.subr.mxu0 0.0
    %1949 = vmatpush1.msra.mxu0 0.0
    %1950 = vmatprep.subr.mxu0 0.0
    %1951 = vmatpush1.msra.mxu0 0.0
    %1952 = vmatprep.subr.mxu0 0.0
    %1953 = vmatpush1.msra.mxu0 0.0
    %1954 = vmatprep.subr.mxu0 0.0
    %1955 = vmatpush1.msra.mxu0 0.0
    %1956 = vmatprep.subr.mxu0 0.0
    %1957 = vmatpush1.msra.mxu0 0.0
    %1958 = vmatprep.subr.mxu0 0.0
    %1959 = vmatpush1.msra.mxu0 0.0
    %1960 = vmatprep.subr.mxu0 0.0
    %1961 = vmatpush1.msra.mxu0 0.0
    %1962 = vmatprep.subr.mxu0 0.0
    %1963 = vmatpush1.msra.mxu0 0.0
    %1964 = vmatprep.subr.mxu0 0.0
    %1965 = vmatpush1.msra.mxu0 0.0
    %1966 = vmatprep.subr.mxu0 0.0
    %1967 = vmatpush1.msra.mxu0 0.0
    %1968 = vmatprep.subr.mxu0 0.0
    %1969 = vmatpush1.msra.mxu0 0.0
    %1970 = vmatprep.subr.mxu0 0.0
    %1971 = vmatpush1.msra.mxu0 0.0
    %1972 = vmatprep.subr.mxu0 0.0
    %1973 = vmatpush1.msra.mxu0 0.0
    %1974 = vmatprep.subr.mxu0 0.0
    %1975 = vmatpush1.msra.mxu0 0.0
    %1976 = vmatprep.subr.mxu0 0.0
    %1977 = vmatpush1.msra.mxu0 0.0
    %1978 = vmatprep.subr.mxu0 0.0
    %1979 = vmatpush1.msra.mxu0 0.0
    %1980 = vmatprep.subr.mxu0 0.0
    %1981 = vmatpush1.msra.mxu0 0.0
    %1982 = vmatprep.mubr.f32.mxu0 0.0
    %1983 = vmatmul.mubr.f32.gmra.mrb[0].mxu0 %v1916
    %v1984 = vpop.f32.mrb[0].mxu0
    %v1985 = vadd.f32 0.0, %v1984
    %v1986 = vpop.f32.mrb[0].mxu0
    %1987 = vdwg.mxu0
    %v1988 = vadd.f32 %v1915, %v1985
    %v1989 = vxor.u32 %v1988, 2147483648
    %v1990 = vmul.f32 %v1989, 1.442695
    %v1991 = vpow.pop %v1990
    %v1992 = vadd.f32 %v1991, 1.0
    %v1993 = vrcp.pop %v1992
    %v1994 = vmul.f32 1.0, %v1993
    %v1995 = vtanh.pop %v1988
    %v1996 = vmul.f32 %v1994, %v1903
    %1998 = vrot.lane.b32.xlu0 %v1995, 64
    %v1999 = vpop.permute.xlu0 %1998
    %v2001 = vmul.f32 %v1994, %v1999
    %2003 = vrot.lane.b32.xlu0 %v2001, 32
    %v2004 = vpop.permute.xlu0 %2003
    %v2006 = vadd.f32 %v1996, %v2004
    %v2007 = vtanh.pop %v2006
    %2009 = vrot.lane.b32.xlu0 %v2007, 64
    %v2010 = vpop.permute.xlu0 %2009
    %v2012 = vmul.f32 %v1994, %v2010
    %2014 = vrot.lane.b32.xlu0 %v2012, 32
    %v2015 = vpop.permute.xlu0 %2014
    %2017 = vst.msk [vmem:[#allocation3 + $0xf] sm:$0x1] %vm471, %v2015
    %v2018 = vld [vmem:[#allocation3] sm:$0xff]
    %v2019 = vld [vmem:[#allocation3 + $0x8] sm:$0xff]
    %v2020 = vld [vmem:[%s9] sm:$0xff]
    %v2021 = vld [vmem:[%s9 + $0x8] sm:$0xff]
    %v2022 = vld [vmem:[%s9 + $0x10] sm:$0xff]
    %v2023 = vld [vmem:[%s9 + $0x18] sm:$0xff]
    %v2024 = vld [vmem:[%s10] sm:$0x1]
    %v2026 = vlaneseq
    %v2027 = vshrl.u32 %v2026, 7
    %v2028 = vsub.s32 0, %v2027
    %v2029 = vrot.slane %v2024, %v2028
    %v2032 = vsel %vm188, %v2018, 0
    %v2035 = vsel %vm188, %v2019, 0
    %2037 = vmatprep.subr.mxu0 0.0
    %2038 = vmatpush1.msra.mxu0 %v2020
    %2039 = vmatprep.subr.mxu0 0.0
    %2040 = vmatpush1.msra.mxu0 %v2021
    %2041 = vmatprep.subr.mxu0 0.0
    %2042 = vmatpush1.msra.mxu0 %v2022
    %2043 = vmatprep.subr.mxu0 0.0
    %2044 = vmatpush1.msra.mxu0 %v2023
    %2045 = vmatprep.subr.mxu0 0.0
    %2046 = vmatpush1.msra.mxu0 0.0
    %2047 = vmatprep.subr.mxu0 0.0
    %2048 = vmatpush1.msra.mxu0 0.0
    %2049 = vmatprep.subr.mxu0 0.0
    %2050 = vmatpush1.msra.mxu0 0.0
    %2051 = vmatprep.subr.mxu0 0.0
    %2052 = vmatpush1.msra.mxu0 0.0
    %2053 = vmatprep.subr.mxu0 0.0
    %2054 = vmatpush1.msra.mxu0 0.0
    %2055 = vmatprep.subr.mxu0 0.0
    %2056 = vmatpush1.msra.mxu0 0.0
    %2057 = vmatprep.subr.mxu0 0.0
    %2058 = vmatpush1.msra.mxu0 0.0
    %2059 = vmatprep.subr.mxu0 0.0
    %2060 = vmatpush1.msra.mxu0 0.0
    %2061 = vmatprep.subr.mxu0 0.0
    %2062 = vmatpush1.msra.mxu0 0.0
    %2063 = vmatprep.subr.mxu0 0.0
    %2064 = vmatpush1.msra.mxu0 0.0
    %2065 = vmatprep.subr.mxu0 0.0
    %2066 = vmatpush1.msra.mxu0 0.0
    %2067 = vmatprep.subr.mxu0 0.0
    %2068 = vmatpush1.msra.mxu0 0.0
    %2069 = vmatprep.subr.mxu0 0.0
    %2070 = vmatpush1.msra.mxu0 0.0
    %2071 = vmatprep.subr.mxu0 0.0
    %2072 = vmatpush1.msra.mxu0 0.0
    %2073 = vmatprep.subr.mxu0 0.0
    %2074 = vmatpush1.msra.mxu0 0.0
    %2075 = vmatprep.subr.mxu0 0.0
    %2076 = vmatpush1.msra.mxu0 0.0
    %2077 = vmatprep.subr.mxu0 0.0
    %2078 = vmatpush1.msra.mxu0 0.0
    %2079 = vmatprep.subr.mxu0 0.0
    %2080 = vmatpush1.msra.mxu0 0.0
    %2081 = vmatprep.subr.mxu0 0.0
    %2082 = vmatpush1.msra.mxu0 0.0
    %2083 = vmatprep.subr.mxu0 0.0
    %2084 = vmatpush1.msra.mxu0 0.0
    %2085 = vmatprep.subr.mxu0 0.0
    %2086 = vmatpush1.msra.mxu0 0.0
    %2087 = vmatprep.subr.mxu0 0.0
    %2088 = vmatpush1.msra.mxu0 0.0
    %2089 = vmatprep.subr.mxu0 0.0
    %2090 = vmatpush1.msra.mxu0 0.0
    %2091 = vmatprep.subr.mxu0 0.0
    %2092 = vmatpush1.msra.mxu0 0.0
    %2093 = vmatprep.subr.mxu0 0.0
    %2094 = vmatpush1.msra.mxu0 0.0
    %2095 = vmatprep.subr.mxu0 0.0
    %2096 = vmatpush1.msra.mxu0 0.0
    %2097 = vmatprep.subr.mxu0 0.0
    %2098 = vmatpush1.msra.mxu0 0.0
    %2099 = vmatprep.subr.mxu0 0.0
    %2100 = vmatpush1.msra.mxu0 0.0
    %2101 = vmatprep.mubr.f32.mxu0 0.0
    %2102 = vmatmul.mubr.f32.gmra.mrb[0].mxu0 %v2032
    %v2103 = vpop.f32.mrb[0].mxu0
    %v2104 = vadd.f32 %v2029, %v2103
    %v2105 = vpop.f32.mrb[0].mxu0
    %2106 = vmatprep.mubr.f32.mxu0 0.0
    %2107 = vmatmul.mubr.f32.gmra.mrb[0].mxu0 %v2035
    %v2108 = vpop.f32.mrb[0].mxu0
    %v2109 = vadd.f32 %v2029, %v2108
    %v2110 = vpop.f32.mrb[0].mxu0
    %2111 = vdwg.mxu0
    %v2112 = vtanh.pop %v2104
    %v2113 = vtanh.pop %v2109
    %v2114 = vsub.f32 %v82, %v2112
    %v2115 = vsub.f32 %v83, %v2113
    %v2116 = vmul.f32 %v2114, %v2114
    %v2117 = vmul.f32 %v2115, %v2115
    %vm2118 = vcmask 64512
    %v2119 = vsel %vm2118, %v2116, 0.0
    %v2120 = vsel %vm2118, %v2117, 0.0
    %v2121 = vadd.f32 %v2119, %v2120
    %2122 = vadd.xlane.f32.xlu0 %v2121
    %v2123 = vpop.xlane.xlu0 %2122
    %v2124 = vrot.slane %v2123, 4
    %v2125 = vadd.f32 %v2123, %v2124
    %v2126 = vrot.slane %v2125, 2
    %v2127 = vadd.f32 %v2125, %v2126
    %v2128 = vrot.slane %v2127, 1
    %v2129 = vadd.f32 %v2127, %v2128
    %s2130 = vtos %v2129
    %s2131 = smul.f32 %s2130, 50.0
    %s2132 = sadd.f32 %s2131, -177.10677
    %v2133 = vrcp.pop 128.0
    %s2134 = vtos %v2133
    %s2135 = smul.f32 %s2132, %s2134
    %v2136 = vstv %s2135
    %vm2137 = vcmask 0
    %2138 = vst.msk [vmem:[#allocation10] sm:$0x1] %vm2137, %v2136
    // Predicated region
    $region58: #{tpu_custom_call.1} parent=1 // pred_check
      _
    $region59: #{tpu_custom_call.1} parent=1 // pred_check_branch
      %2140 = sbr.rel (0) target = $region61
    $region60: #{tpu_custom_call.1} parent=1 // pred_region
      %s2142 = ssub.s32 16, 16
      %2143 = vsyncadd [#allocation6], %s2142
      %s2145 = sshll.u32 [#allocation10], 4
      %s2146 = int_to_ptr.vmem [resolvable:$true] %s2145
      %2148 = dma.vmem_to_hbm [thread:$0]  %s2146, 16, %s11, [#allocation6]
    $region61: #{tpu_custom_call.1} parent=1 // pred_fallthru
      _
    // Predicated region
    $region62: #{tpu_custom_call.1} parent=1 // pred_check
      _
    $region63: #{tpu_custom_call.1} parent=1 // pred_check_branch
      %2150 = sbr.rel (0) target = $region65
    $region64: #{tpu_custom_call.1} parent=1 // pred_region
      %2151 = dma.done [#allocation6], 16
    $region65: #{tpu_custom_call.1} parent=1 // pred_fallthru
      _
    %2152 = vsyncpa [#allocation5], 1
    %2153 = vsyncpa [#allocation8], 1
    %2154 = vsyncpa [#allocation6], 1

</llo_original>
